<compile_context>
chip_gen: v7x
topology: tpu7x:2x2x1
jax: 0.10.0
libtpu: 0.0.40
codegen_flags: <defaults>
</compile_context>

<pallas_src>
import functools

import jax
import jax.numpy as jnp
import numpy as np
from jax.experimental import pallas as pl
from jax.experimental.pallas import tpu as pltpu

EPS = 1e-5  # PyTorch BatchNorm default eps


# --------------------------------------------------------------------------
# Pass 1: direct 3x3x3 conv (27 small matmuls) + per-plane batch-stat partials.
# --------------------------------------------------------------------------
def conv_stats_kernel(x0_ref, x1_ref, x2_ref, w_ref, mask_ref,
                      y_ref, psum_ref, psumsq_ref, *, w_plus2):
    # x{kd}_ref : [1, C_in, XW] bf16   padded input plane (d + kd)
    # w_ref     : [27, C_out, C_in] bf16 (resident)
    # mask_ref  : [1, CW] f32  (1.0 at valid in-plane positions)
    # y_ref     : [1, C_out, CW] bf16  conv output plane (padded layout)
    # psum_ref / psumsq_ref : [1, 1, C_out, 1] f32 per-plane partial stats
    c_out = y_ref.shape[1]
    cw = y_ref.shape[2]

    planes = (x0_ref[0], x1_ref[0], x2_ref[0])      # each [C_in, XW]
    acc = jnp.zeros((c_out, cw), jnp.float32)
    for kd in range(3):
        xpl = planes[kd]
        for kh in range(3):
            for kw in range(3):
                s = kh * w_plus2 + kw                # static in-plane offset
                slab = xpl[:, s:s + cw]              # [C_in, CW] static slice
                wt = w_ref[kd * 9 + kh * 3 + kw]     # [C_out, C_in]
                acc = acc + jnp.dot(wt, slab,
                                    preferred_element_type=jnp.float32)

    y_ref[0] = acc.astype(y_ref.dtype)

    # Mask out padded / junk columns so they do not pollute the batch stats.
    ym = acc * mask_ref[...]
    psum_ref[...] = jnp.sum(ym, axis=1, keepdims=True)[None, None]
    psumsq_ref[...] = jnp.sum(ym * ym, axis=1, keepdims=True)[None, None]


# --------------------------------------------------------------------------
# Pass 2: per-channel affine (folded BN) + activation.
# --------------------------------------------------------------------------
def bn_act_kernel(y_ref, params_ref, out_ref, *, act):
    # y_ref      : [1, C_out, CW] bf16
    # params_ref : [C_out, 3] f32   (columns: scale, shift, prelu-alpha)
    scale = params_ref[:, 0:1]
    shift = params_ref[:, 1:2]
    z = y_ref[0].astype(jnp.float32) * scale + shift
    if act == 'relu':
        out = jnp.maximum(z, 0.0)
    elif act == 'prelu':
        alpha = params_ref[:, 2:3]
        out = jnp.where(z >= 0.0, z, alpha * z)
    elif act == 'elu':
        out = jnp.where(z > 0.0, z, jnp.expm1(z))
    elif act == 'swish':
        out = z * jax.nn.sigmoid(z)
    else:
        raise ValueError(f"unsupported act: {act}")
    out_ref[0] = out.astype(out_ref.dtype)


# --------------------------------------------------------------------------
# Wrapper: PyTorch NCDHW in / NCDHW out.
# --------------------------------------------------------------------------
@functools.partial(jax.jit, static_argnames=("act", "out_dtype"))
def luconv_forward(x, weight, bias, gamma, beta, alpha, act='relu',
                   out_dtype=jnp.float32):
    """x: [N, C_in, D, H, W]; weight: [C_out, C_in, 3, 3, 3] (PyTorch layout)."""
    N, C_in, D, H, W = x.shape
    C_out = weight.shape[0]
    assert weight.shape == (C_out, C_in, 3, 3, 3)
    if act not in ('relu', 'prelu', 'elu', 'swish'):
        raise ValueError(act)
    # Conv bias cancels exactly through the always-batch-stats BN, so it is
    # never needed for the forward output (kept in the signature for parity).
    del bias

    PP = (H + 2) * (W + 2)                 # padded in-plane size
    s_max = 2 * (W + 2) + 2                # largest in-plane tap offset
    CW = pl.cdiv(PP, 128) * 128            # lane-dense output plane width
    XW = pl.cdiv(CW + s_max, 128) * 128    # input slab width (slices in-bounds)
    NP = N * (D + 2)                       # padded input planes

    # ---- bf16 channel-minor padded input: [N*(D+2), C_in, XW] ----
    xb = x.astype(jnp.bfloat16)
    xpad = jnp.pad(xb, ((0, 0), (0, 0), (1, 1), (1, 1), (1, 1)))
    xp = xpad.transpose(0, 2, 1, 3, 4).reshape(NP, C_in, PP)
    xp = jnp.pad(xp, ((0, 0), (0, 0), (0, XW - PP)))

    # ---- weights: [27, C_out, C_in] bf16 ----
    w_t = jnp.transpose(weight, (2, 3, 4, 0, 1)).reshape(27, C_out, C_in)
    w_t = w_t.astype(jnp.bfloat16)

    # ---- static validity mask over the CW padded-plane columns ----
    col = np.arange(CW)
    valid = (col < PP) & (col % (W + 2) < W) & (col // (W + 2) < H)
    mask = jnp.asarray(valid.astype(np.float32)[None, :])       # [1, CW]

    def x_spec(kd):
        return pl.BlockSpec(
            (1, C_in, XW),
            lambda n, d, kd=kd: (n * (D + 2) + d + kd, 0, 0))

    # VMEM budget derived from the actual tiles (double-buffered inputs).
    vmem1_est = (2 * 3 * C_in * XW * 2        # 3 aliased x-plane buffers
                 + 2 * 27 * C_out * C_in * 2  # resident weights
                 + 2 * CW * 4                 # mask
                 + 2 * C_out * CW * 2         # y tile
                 + 4 * C_out * 4              # partial sums
                 + 2 * C_out * CW * 4         # f32 accumulator / temporaries
                 + (2 << 20))
    vmem1 = int(min(100 << 20, max(32 << 20, vmem1_est)))

    flops1 = 2 * 27 * C_in * C_out * N * D * CW
    bytes1 = (N * D * (3 * C_in * XW * 2 + C_out * CW * 2)
              + 27 * C_out * C_in * 2 + 2 * N * D * C_out * 4 + CW * 4)

    # ---- pass 1: conv planes + per-plane batch-stat partials ----
    y_t, psum, psumsq = pl.pallas_call(
        functools.partial(conv_stats_kernel, w_plus2=W + 2),
        grid=(N, D),
        in_specs=[
            x_spec(0), x_spec(1), x_spec(2),
            pl.BlockSpec((27, C_out, C_in), lambda n, d: (0, 0, 0)),
            pl.BlockSpec((1, CW), lambda n, d: (0, 0)),
        ],
        out_specs=[
            pl.BlockSpec((1, C_out, CW), lambda n, d: (n, 0, d)),
            pl.BlockSpec((1, 1, C_out, 1), lambda n, d: (n, d, 0, 0)),
            pl.BlockSpec((1, 1, C_out, 1), lambda n, d: (n, d, 0, 0)),
        ],
        out_shape=[
            jax.ShapeDtypeStruct((N, C_out, D * CW), jnp.bfloat16),
            jax.ShapeDtypeStruct((N, D, C_out, 1), jnp.float32),
            jax.ShapeDtypeStruct((N, D, C_out, 1), jnp.float32),
        ],
        compiler_params=pltpu.CompilerParams(
            dimension_semantics=("parallel", "parallel"),
            vmem_limit_bytes=vmem1),
        cost_estimate=pl.CostEstimate(
            flops=flops1, transcendentals=0, bytes_accessed=bytes1),
    )(xp, xp, xp, w_t, mask)

    # ---- finalize BN stats -> per-channel scale/shift (tiny [C_out] math) ----
    cnt = jnp.float32(N * D * H * W)
    s_tot = jnp.sum(psum[..., 0], axis=(0, 1))        # [C_out]
    ss_tot = jnp.sum(psumsq[..., 0], axis=(0, 1))     # [C_out]
    mean = s_tot / cnt
    var = jnp.maximum(ss_tot / cnt - mean * mean, 0.0)   # biased variance
    scale = gamma.astype(jnp.float32) * jax.lax.rsqrt(var + EPS)
    shift = beta.astype(jnp.float32) - mean * scale
    params = jnp.stack([scale, shift, alpha.astype(jnp.float32)], axis=1)

    out_bytes = jnp.dtype(out_dtype).itemsize
    flops2 = 5 * N * D * CW * C_out
    trans2 = N * D * CW * C_out if act in ('elu', 'swish') else 0
    bytes2 = N * D * C_out * CW * (2 + out_bytes) + C_out * 3 * 4

    # ---- pass 2: normalize + activation (fully parallel, lane-dense) ----
    out_padded = pl.pallas_call(
        functools.partial(bn_act_kernel, act=act),
        grid=(N, D),
        in_specs=[
            pl.BlockSpec((1, C_out, CW), lambda n, d: (n, 0, d)),
            pl.BlockSpec((C_out, 3), lambda n, d: (0, 0)),
        ],
        out_specs=pl.BlockSpec((1, C_out, CW), lambda n, d: (n, 0, d)),
        out_shape=jax.ShapeDtypeStruct((N, C_out, D * CW), out_dtype),
        compiler_params=pltpu.CompilerParams(
            dimension_semantics=("parallel", "parallel"),
            vmem_limit_bytes=int(min(100 << 20,
                                     max(32 << 20,
                                         6 * C_out * CW * 4 + (2 << 20))))),
        cost_estimate=pl.CostEstimate(
            flops=flops2, transcendentals=trans2, bytes_accessed=bytes2),
    )(y_t, params)

    # ---- NCDHW output via a cheap slice (no transpose) ----
    out = out_padded.reshape(N, C_out, D, CW)[:, :, :, :PP]
    out = out.reshape(N, C_out, D, H + 2, W + 2)[:, :, :, :H, :W]
    return out


# --------------------------------------------------------------------------
# Pure-JAX f32 reference (includes the conv bias; it cancels through BN).
# --------------------------------------------------------------------------
def reference_luconv(x, weight, bias, gamma, beta, alpha, act='relu'):
    y = jax.lax.conv_general_dilated(
        x, weight, window_strides=(1, 1, 1), padding=[(1, 1)] * 3,
        dimension_numbers=('NCDHW', 'OIDHW', 'NCDHW'),
        precision=jax.lax.Precision.HIGHEST)
    y = y + bias.reshape(1, -1, 1, 1, 1)
    mean = jnp.mean(y, axis=(0, 2, 3, 4), keepdims=True)
    var = jnp.var(y, axis=(0, 2, 3, 4), keepdims=True)
    z = gamma.reshape(1, -1, 1, 1, 1) * (y - mean) / jnp.sqrt(var + EPS) \
        + beta.reshape(1, -1, 1, 1, 1)
    if act == 'relu':
        return jnp.maximum(z, 0.0)
    elif act == 'prelu':
        return jnp.where(z >= 0.0, z, alpha.reshape(1, -1, 1, 1, 1) * z)
    elif act == 'elu':
        return jnp.where(z > 0.0, z, jnp.expm1(z))
    elif act == 'swish':
        return z * jax.nn.sigmoid(z)
    raise ValueError(act)


if __name__ == "__main__":
    # Small shapes: 2 samples, 4->8 channels, 6x8x8 volume.
    N, C_in, C_out, D, H, W = 2, 4, 8, 6, 8, 8

    key = jax.random.PRNGKey(0)
    kx, kw, kb, kg, kbeta = jax.random.split(key, 5)

    x = jax.random.normal(kx, (N, C_in, D, H, W), dtype=jnp.float32)
    weight = jax.random.normal(kw, (C_out, C_in, 3, 3, 3), dtype=jnp.float32) * 0.1
    bias = jax.random.normal(kb, (C_out,), dtype=jnp.float32) * 0.1
    gamma = 1.0 + 0.1 * jax.random.normal(kg, (C_out,), dtype=jnp.float32)
    beta = 0.1 * jax.random.normal(kbeta, (C_out,), dtype=jnp.float32)
    alpha = jnp.full((C_out,), 0.25, dtype=jnp.float32)  # PReLU default init

    for act in ('relu', 'prelu', 'elu', 'swish'):
        out = luconv_forward(x, weight, bias, gamma, beta, alpha, act=act)
        out = jax.block_until_ready(out)
        ref = jax.block_until_ready(
            reference_luconv(x, weight, bias, gamma, beta, alpha, act=act))

        assert out.shape == (N, C_out, D, H, W)
        assert bool(jnp.all(jnp.isfinite(out)))
        # bf16 MXU inputs + bf16 inter-pass intermediate vs an f32
        # HIGHEST-precision reference: keep a slightly wider atol.
        np.testing.assert_allclose(np.asarray(out), np.asarray(ref),
                                   rtol=1e-2, atol=2e-2)

    print("KERNEL_OK")
</pallas_src>

<mosaic_0001>
module attributes {stable_mosaic.version = 11 : i64} {
  func.func @conv_stats_kernel(%arg0: i32, %arg1: i32, %arg2: memref<1x4x256xbf16, #tpu.memory_space<vmem>>, %arg3: memref<1x4x256xbf16, #tpu.memory_space<vmem>>, %arg4: memref<1x4x256xbf16, #tpu.memory_space<vmem>>, %arg5: memref<27x8x4xbf16, #tpu.memory_space<vmem>>, %arg6: memref<1x128xf32, #tpu.memory_space<vmem>>, %arg7: memref<1x8x128xbf16, #tpu.memory_space<vmem>>, %arg8: memref<1x1x8x1xf32, #tpu.memory_space<vmem>>, %arg9: memref<1x1x8x1xf32, #tpu.memory_space<vmem>>) attributes {dimension_semantics = [#tpu.dimension_semantics<parallel>, #tpu.dimension_semantics<parallel>], iteration_bounds = array<i64: 2, 6>, scalar_prefetch = 0 : i64, scratch_operands = 0 : i64, tpu.core_type = #tpu.core_type<tc>, window_params = [{transform_indices = @transform_0, window_bounds = array<i64: 1, 4, 256>}, {transform_indices = @transform_1, window_bounds = array<i64: 1, 4, 256>}, {transform_indices = @transform_2, window_bounds = array<i64: 1, 4, 256>}, {pipeline_mode = #tpu.pipeline_mode<synchronous>, transform_indices = @transform_3, window_bounds = array<i64: 27, 8, 4>}, {pipeline_mode = #tpu.pipeline_mode<synchronous>, transform_indices = @transform_4, window_bounds = array<i64: 1, 128>}, {transform_indices = @transform_5, window_bounds = array<i64: 1, 8, 128>}, {transform_indices = @transform_6, window_bounds = array<i64: 1, 1, 8, 1>}, {transform_indices = @transform_7, window_bounds = array<i64: 1, 1, 8, 1>}]} {
    %c0 = arith.constant 0 : index
    %c0_0 = arith.constant 0 : index
    %c0_1 = arith.constant 0 : index
    %0 = vector.load %arg2[%c0, %c0_0, %c0_1] : memref<1x4x256xbf16, #tpu.memory_space<vmem>>, vector<1x4x256xbf16>
    %1 = vector.shape_cast %0 : vector<1x4x256xbf16> to vector<4x256xbf16>
    %c0_2 = arith.constant 0 : index
    %c0_3 = arith.constant 0 : index
    %c0_4 = arith.constant 0 : index
    %2 = vector.load %arg3[%c0_2, %c0_3, %c0_4] : memref<1x4x256xbf16, #tpu.memory_space<vmem>>, vector<1x4x256xbf16>
    %3 = vector.shape_cast %2 : vector<1x4x256xbf16> to vector<4x256xbf16>
    %c0_5 = arith.constant 0 : index
    %c0_6 = arith.constant 0 : index
    %c0_7 = arith.constant 0 : index
    %4 = vector.load %arg4[%c0_5, %c0_6, %c0_7] : memref<1x4x256xbf16, #tpu.memory_space<vmem>>, vector<1x4x256xbf16>
    %5 = vector.shape_cast %4 : vector<1x4x256xbf16> to vector<4x256xbf16>
    %cst = arith.constant 0.000000e+00 : f32
    %6 = vector.broadcast %cst : f32 to vector<8x128xf32>
    %7 = vector.extract_strided_slice %1 {offsets = [0, 0], sizes = [4, 128], strides = [1, 1]} : vector<4x256xbf16> to vector<4x128xbf16>
    %c0_8 = arith.constant 0 : index
    %c0_9 = arith.constant 0 : index
    %c0_10 = arith.constant 0 : index
    %8 = vector.load %arg5[%c0_8, %c0_9, %c0_10] : memref<27x8x4xbf16, #tpu.memory_space<vmem>>, vector<1x8x4xbf16>
    %9 = vector.shape_cast %8 : vector<1x8x4xbf16> to vector<8x4xbf16>
    %cst_11 = arith.constant dense<0.000000e+00> : vector<8x128xf32>
    %10 = tpu.matmul %9, %7, %cst_11 {dimension_numbers = #tpu.dot_dimension_numbers<[1], [0], [0], [1], [0, 0, 1, 1], [], []>} : vector<8x4xbf16>, vector<4x128xbf16>, vector<8x128xf32> -> vector<8x128xf32>
    %11 = arith.addf %6, %10 : vector<8x128xf32>
    %12 = vector.extract_strided_slice %1 {offsets = [0, 1], sizes = [4, 128], strides = [1, 1]} : vector<4x256xbf16> to vector<4x128xbf16>
    %c1 = arith.constant 1 : index
    %c0_12 = arith.constant 0 : index
    %c0_13 = arith.constant 0 : index
    %13 = vector.load %arg5[%c1, %c0_12, %c0_13] : memref<27x8x4xbf16, #tpu.memory_space<vmem>>, vector<1x8x4xbf16>
    %14 = vector.shape_cast %13 : vector<1x8x4xbf16> to vector<8x4xbf16>
    %cst_14 = arith.constant dense<0.000000e+00> : vector<8x128xf32>
    %15 = tpu.matmul %14, %12, %cst_14 {dimension_numbers = #tpu.dot_dimension_numbers<[1], [0], [0], [1], [0, 0, 1, 1], [], []>} : vector<8x4xbf16>, vector<4x128xbf16>, vector<8x128xf32> -> vector<8x128xf32>
    %16 = arith.addf %11, %15 : vector<8x128xf32>
    %17 = vector.extract_strided_slice %1 {offsets = [0, 2], sizes = [4, 128], strides = [1, 1]} : vector<4x256xbf16> to vector<4x128xbf16>
    %c2 = arith.constant 2 : index
    %c0_15 = arith.constant 0 : index
    %c0_16 = arith.constant 0 : index
    %18 = vector.load %arg5[%c2, %c0_15, %c0_16] : memref<27x8x4xbf16, #tpu.memory_space<vmem>>, vector<1x8x4xbf16>
    %19 = vector.shape_cast %18 : vector<1x8x4xbf16> to vector<8x4xbf16>
    %cst_17 = arith.constant dense<0.000000e+00> : vector<8x128xf32>
    %20 = tpu.matmul %19, %17, %cst_17 {dimension_numbers = #tpu.dot_dimension_numbers<[1], [0], [0], [1], [0, 0, 1, 1], [], []>} : vector<8x4xbf16>, vector<4x128xbf16>, vector<8x128xf32> -> vector<8x128xf32>
    %21 = arith.addf %16, %20 : vector<8x128xf32>
    %22 = vector.extract_strided_slice %1 {offsets = [0, 10], sizes = [4, 128], strides = [1, 1]} : vector<4x256xbf16> to vector<4x128xbf16>
    %c3 = arith.constant 3 : index
    %c0_18 = arith.constant 0 : index
    %c0_19 = arith.constant 0 : index
    %23 = vector.load %arg5[%c3, %c0_18, %c0_19] : memref<27x8x4xbf16, #tpu.memory_space<vmem>>, vector<1x8x4xbf16>
    %24 = vector.shape_cast %23 : vector<1x8x4xbf16> to vector<8x4xbf16>
    %cst_20 = arith.constant dense<0.000000e+00> : vector<8x128xf32>
    %25 = tpu.matmul %24, %22, %cst_20 {dimension_numbers = #tpu.dot_dimension_numbers<[1], [0], [0], [1], [0, 0, 1, 1], [], []>} : vector<8x4xbf16>, vector<4x128xbf16>, vector<8x128xf32> -> vector<8x128xf32>
    %26 = arith.addf %21, %25 : vector<8x128xf32>
    %27 = vector.extract_strided_slice %1 {offsets = [0, 11], sizes = [4, 128], strides = [1, 1]} : vector<4x256xbf16> to vector<4x128xbf16>
    %c4 = arith.constant 4 : index
    %c0_21 = arith.constant 0 : index
    %c0_22 = arith.constant 0 : index
    %28 = vector.load %arg5[%c4, %c0_21, %c0_22] : memref<27x8x4xbf16, #tpu.memory_space<vmem>>, vector<1x8x4xbf16>
    %29 = vector.shape_cast %28 : vector<1x8x4xbf16> to vector<8x4xbf16>
    %cst_23 = arith.constant dense<0.000000e+00> : vector<8x128xf32>
    %30 = tpu.matmul %29, %27, %cst_23 {dimension_numbers = #tpu.dot_dimension_numbers<[1], [0], [0], [1], [0, 0, 1, 1], [], []>} : vector<8x4xbf16>, vector<4x128xbf16>, vector<8x128xf32> -> vector<8x128xf32>
    %31 = arith.addf %26, %30 : vector<8x128xf32>
    %32 = vector.extract_strided_slice %1 {offsets = [0, 12], sizes = [4, 128], strides = [1, 1]} : vector<4x256xbf16> to vector<4x128xbf16>
    %c5 = arith.constant 5 : index
    %c0_24 = arith.constant 0 : index
    %c0_25 = arith.constant 0 : index
    %33 = vector.load %arg5[%c5, %c0_24, %c0_25] : memref<27x8x4xbf16, #tpu.memory_space<vmem>>, vector<1x8x4xbf16>
    %34 = vector.shape_cast %33 : vector<1x8x4xbf16> to vector<8x4xbf16>
    %cst_26 = arith.constant dense<0.000000e+00> : vector<8x128xf32>
    %35 = tpu.matmul %34, %32, %cst_26 {dimension_numbers = #tpu.dot_dimension_numbers<[1], [0], [0], [1], [0, 0, 1, 1], [], []>} : vector<8x4xbf16>, vector<4x128xbf16>, vector<8x128xf32> -> vector<8x128xf32>
    %36 = arith.addf %31, %35 : vector<8x128xf32>
    %37 = vector.extract_strided_slice %1 {offsets = [0, 20], sizes = [4, 128], strides = [1, 1]} : vector<4x256xbf16> to vector<4x128xbf16>
    %c6 = arith.constant 6 : index
    %c0_27 = arith.constant 0 : index
    %c0_28 = arith.constant 0 : index
    %38 = vector.load %arg5[%c6, %c0_27, %c0_28] : memref<27x8x4xbf16, #tpu.memory_space<vmem>>, vector<1x8x4xbf16>
    %39 = vector.shape_cast %38 : vector<1x8x4xbf16> to vector<8x4xbf16>
    %cst_29 = arith.constant dense<0.000000e+00> : vector<8x128xf32>
    %40 = tpu.matmul %39, %37, %cst_29 {dimension_numbers = #tpu.dot_dimension_numbers<[1], [0], [0], [1], [0, 0, 1, 1], [], []>} : vector<8x4xbf16>, vector<4x128xbf16>, vector<8x128xf32> -> vector<8x128xf32>
    %41 = arith.addf %36, %40 : vector<8x128xf32>
    %42 = vector.extract_strided_slice %1 {offsets = [0, 21], sizes = [4, 128], strides = [1, 1]} : vector<4x256xbf16> to vector<4x128xbf16>
    %c7 = arith.constant 7 : index
    %c0_30 = arith.constant 0 : index
    %c0_31 = arith.constant 0 : index
    %43 = vector.load %arg5[%c7, %c0_30, %c0_31] : memref<27x8x4xbf16, #tpu.memory_space<vmem>>, vector<1x8x4xbf16>
    %44 = vector.shape_cast %43 : vector<1x8x4xbf16> to vector<8x4xbf16>
    %cst_32 = arith.constant dense<0.000000e+00> : vector<8x128xf32>
    %45 = tpu.matmul %44, %42, %cst_32 {dimension_numbers = #tpu.dot_dimension_numbers<[1], [0], [0], [1], [0, 0, 1, 1], [], []>} : vector<8x4xbf16>, vector<4x128xbf16>, vector<8x128xf32> -> vector<8x128xf32>
    %46 = arith.addf %41, %45 : vector<8x128xf32>
    %47 = vector.extract_strided_slice %1 {offsets = [0, 22], sizes = [4, 128], strides = [1, 1]} : vector<4x256xbf16> to vector<4x128xbf16>
    %c8 = arith.constant 8 : index
    %c0_33 = arith.constant 0 : index
    %c0_34 = arith.constant 0 : index
    %48 = vector.load %arg5[%c8, %c0_33, %c0_34] : memref<27x8x4xbf16, #tpu.memory_space<vmem>>, vector<1x8x4xbf16>
    %49 = vector.shape_cast %48 : vector<1x8x4xbf16> to vector<8x4xbf16>
    %cst_35 = arith.constant dense<0.000000e+00> : vector<8x128xf32>
    %50 = tpu.matmul %49, %47, %cst_35 {dimension_numbers = #tpu.dot_dimension_numbers<[1], [0], [0], [1], [0, 0, 1, 1], [], []>} : vector<8x4xbf16>, vector<4x128xbf16>, vector<8x128xf32> -> vector<8x128xf32>
    %51 = arith.addf %46, %50 : vector<8x128xf32>
    %52 = vector.extract_strided_slice %3 {offsets = [0, 0], sizes = [4, 128], strides = [1, 1]} : vector<4x256xbf16> to vector<4x128xbf16>
    %c9 = arith.constant 9 : index
    %c0_36 = arith.constant 0 : index
    %c0_37 = arith.constant 0 : index
    %53 = vector.load %arg5[%c9, %c0_36, %c0_37] : memref<27x8x4xbf16, #tpu.memory_space<vmem>>, vector<1x8x4xbf16>
    %54 = vector.shape_cast %53 : vector<1x8x4xbf16> to vector<8x4xbf16>
    %cst_38 = arith.constant dense<0.000000e+00> : vector<8x128xf32>
    %55 = tpu.matmul %54, %52, %cst_38 {dimension_numbers = #tpu.dot_dimension_numbers<[1], [0], [0], [1], [0, 0, 1, 1], [], []>} : vector<8x4xbf16>, vector<4x128xbf16>, vector<8x128xf32> -> vector<8x128xf32>
    %56 = arith.addf %51, %55 : vector<8x128xf32>
    %57 = vector.extract_strided_slice %3 {offsets = [0, 1], sizes = [4, 128], strides = [1, 1]} : vector<4x256xbf16> to vector<4x128xbf16>
    %c10 = arith.constant 10 : index
    %c0_39 = arith.constant 0 : index
    %c0_40 = arith.constant 0 : index
    %58 = vector.load %arg5[%c10, %c0_39, %c0_40] : memref<27x8x4xbf16, #tpu.memory_space<vmem>>, vector<1x8x4xbf16>
    %59 = vector.shape_cast %58 : vector<1x8x4xbf16> to vector<8x4xbf16>
    %cst_41 = arith.constant dense<0.000000e+00> : vector<8x128xf32>
    %60 = tpu.matmul %59, %57, %cst_41 {dimension_numbers = #tpu.dot_dimension_numbers<[1], [0], [0], [1], [0, 0, 1, 1], [], []>} : vector<8x4xbf16>, vector<4x128xbf16>, vector<8x128xf32> -> vector<8x128xf32>
    %61 = arith.addf %56, %60 : vector<8x128xf32>
    %62 = vector.extract_strided_slice %3 {offsets = [0, 2], sizes = [4, 128], strides = [1, 1]} : vector<4x256xbf16> to vector<4x128xbf16>
    %c11 = arith.constant 11 : index
    %c0_42 = arith.constant 0 : index
    %c0_43 = arith.constant 0 : index
    %63 = vector.load %arg5[%c11, %c0_42, %c0_43] : memref<27x8x4xbf16, #tpu.memory_space<vmem>>, vector<1x8x4xbf16>
    %64 = vector.shape_cast %63 : vector<1x8x4xbf16> to vector<8x4xbf16>
    %cst_44 = arith.constant dense<0.000000e+00> : vector<8x128xf32>
    %65 = tpu.matmul %64, %62, %cst_44 {dimension_numbers = #tpu.dot_dimension_numbers<[1], [0], [0], [1], [0, 0, 1, 1], [], []>} : vector<8x4xbf16>, vector<4x128xbf16>, vector<8x128xf32> -> vector<8x128xf32>
    %66 = arith.addf %61, %65 : vector<8x128xf32>
    %67 = vector.extract_strided_slice %3 {offsets = [0, 10], sizes = [4, 128], strides = [1, 1]} : vector<4x256xbf16> to vector<4x128xbf16>
    %c12 = arith.constant 12 : index
    %c0_45 = arith.constant 0 : index
    %c0_46 = arith.constant 0 : index
    %68 = vector.load %arg5[%c12, %c0_45, %c0_46] : memref<27x8x4xbf16, #tpu.memory_space<vmem>>, vector<1x8x4xbf16>
    %69 = vector.shape_cast %68 : vector<1x8x4xbf16> to vector<8x4xbf16>
    %cst_47 = arith.constant dense<0.000000e+00> : vector<8x128xf32>
    %70 = tpu.matmul %69, %67, %cst_47 {dimension_numbers = #tpu.dot_dimension_numbers<[1], [0], [0], [1], [0, 0, 1, 1], [], []>} : vector<8x4xbf16>, vector<4x128xbf16>, vector<8x128xf32> -> vector<8x128xf32>
    %71 = arith.addf %66, %70 : vector<8x128xf32>
    %72 = vector.extract_strided_slice %3 {offsets = [0, 11], sizes = [4, 128], strides = [1, 1]} : vector<4x256xbf16> to vector<4x128xbf16>
    %c13 = arith.constant 13 : index
    %c0_48 = arith.constant 0 : index
    %c0_49 = arith.constant 0 : index
    %73 = vector.load %arg5[%c13, %c0_48, %c0_49] : memref<27x8x4xbf16, #tpu.memory_space<vmem>>, vector<1x8x4xbf16>
    %74 = vector.shape_cast %73 : vector<1x8x4xbf16> to vector<8x4xbf16>
    %cst_50 = arith.constant dense<0.000000e+00> : vector<8x128xf32>
    %75 = tpu.matmul %74, %72, %cst_50 {dimension_numbers = #tpu.dot_dimension_numbers<[1], [0], [0], [1], [0, 0, 1, 1], [], []>} : vector<8x4xbf16>, vector<4x128xbf16>, vector<8x128xf32> -> vector<8x128xf32>
    %76 = arith.addf %71, %75 : vector<8x128xf32>
    %77 = vector.extract_strided_slice %3 {offsets = [0, 12], sizes = [4, 128], strides = [1, 1]} : vector<4x256xbf16> to vector<4x128xbf16>
    %c14 = arith.constant 14 : index
    %c0_51 = arith.constant 0 : index
    %c0_52 = arith.constant 0 : index
    %78 = vector.load %arg5[%c14, %c0_51, %c0_52] : memref<27x8x4xbf16, #tpu.memory_space<vmem>>, vector<1x8x4xbf16>
    %79 = vector.shape_cast %78 : vector<1x8x4xbf16> to vector<8x4xbf16>
    %cst_53 = arith.constant dense<0.000000e+00> : vector<8x128xf32>
    %80 = tpu.matmul %79, %77, %cst_53 {dimension_numbers = #tpu.dot_dimension_numbers<[1], [0], [0], [1], [0, 0, 1, 1], [], []>} : vector<8x4xbf16>, vector<4x128xbf16>, vector<8x128xf32> -> vector<8x128xf32>
    %81 = arith.addf %76, %80 : vector<8x128xf32>
    %82 = vector.extract_strided_slice %3 {offsets = [0, 20], sizes = [4, 128], strides = [1, 1]} : vector<4x256xbf16> to vector<4x128xbf16>
    %c15 = arith.constant 15 : index
    %c0_54 = arith.constant 0 : index
    %c0_55 = arith.constant 0 : index
    %83 = vector.load %arg5[%c15, %c0_54, %c0_55] : memref<27x8x4xbf16, #tpu.memory_space<vmem>>, vector<1x8x4xbf16>
    %84 = vector.shape_cast %83 : vector<1x8x4xbf16> to vector<8x4xbf16>
    %cst_56 = arith.constant dense<0.000000e+00> : vector<8x128xf32>
    %85 = tpu.matmul %84, %82, %cst_56 {dimension_numbers = #tpu.dot_dimension_numbers<[1], [0], [0], [1], [0, 0, 1, 1], [], []>} : vector<8x4xbf16>, vector<4x128xbf16>, vector<8x128xf32> -> vector<8x128xf32>
    %86 = arith.addf %81, %85 : vector<8x128xf32>
    %87 = vector.extract_strided_slice %3 {offsets = [0, 21], sizes = [4, 128], strides = [1, 1]} : vector<4x256xbf16> to vector<4x128xbf16>
    %c16 = arith.constant 16 : index
    %c0_57 = arith.constant 0 : index
    %c0_58 = arith.constant 0 : index
    %88 = vector.load %arg5[%c16, %c0_57, %c0_58] : memref<27x8x4xbf16, #tpu.memory_space<vmem>>, vector<1x8x4xbf16>
    %89 = vector.shape_cast %88 : vector<1x8x4xbf16> to vector<8x4xbf16>
    %cst_59 = arith.constant dense<0.000000e+00> : vector<8x128xf32>
    %90 = tpu.matmul %89, %87, %cst_59 {dimension_numbers = #tpu.dot_dimension_numbers<[1], [0], [0], [1], [0, 0, 1, 1], [], []>} : vector<8x4xbf16>, vector<4x128xbf16>, vector<8x128xf32> -> vector<8x128xf32>
    %91 = arith.addf %86, %90 : vector<8x128xf32>
    %92 = vector.extract_strided_slice %3 {offsets = [0, 22], sizes = [4, 128], strides = [1, 1]} : vector<4x256xbf16> to vector<4x128xbf16>
    %c17 = arith.constant 17 : index
    %c0_60 = arith.constant 0 : index
    %c0_61 = arith.constant 0 : index
    %93 = vector.load %arg5[%c17, %c0_60, %c0_61] : memref<27x8x4xbf16, #tpu.memory_space<vmem>>, vector<1x8x4xbf16>
    %94 = vector.shape_cast %93 : vector<1x8x4xbf16> to vector<8x4xbf16>
    %cst_62 = arith.constant dense<0.000000e+00> : vector<8x128xf32>
    %95 = tpu.matmul %94, %92, %cst_62 {dimension_numbers = #tpu.dot_dimension_numbers<[1], [0], [0], [1], [0, 0, 1, 1], [], []>} : vector<8x4xbf16>, vector<4x128xbf16>, vector<8x128xf32> -> vector<8x128xf32>
    %96 = arith.addf %91, %95 : vector<8x128xf32>
    %97 = vector.extract_strided_slice %5 {offsets = [0, 0], sizes = [4, 128], strides = [1, 1]} : vector<4x256xbf16> to vector<4x128xbf16>
    %c18 = arith.constant 18 : index
    %c0_63 = arith.constant 0 : index
    %c0_64 = arith.constant 0 : index
    %98 = vector.load %arg5[%c18, %c0_63, %c0_64] : memref<27x8x4xbf16, #tpu.memory_space<vmem>>, vector<1x8x4xbf16>
    %99 = vector.shape_cast %98 : vector<1x8x4xbf16> to vector<8x4xbf16>
    %cst_65 = arith.constant dense<0.000000e+00> : vector<8x128xf32>
    %100 = tpu.matmul %99, %97, %cst_65 {dimension_numbers = #tpu.dot_dimension_numbers<[1], [0], [0], [1], [0, 0, 1, 1], [], []>} : vector<8x4xbf16>, vector<4x128xbf16>, vector<8x128xf32> -> vector<8x128xf32>
    %101 = arith.addf %96, %100 : vector<8x128xf32>
    %102 = vector.extract_strided_slice %5 {offsets = [0, 1], sizes = [4, 128], strides = [1, 1]} : vector<4x256xbf16> to vector<4x128xbf16>
    %c19 = arith.constant 19 : index
    %c0_66 = arith.constant 0 : index
    %c0_67 = arith.constant 0 : index
    %103 = vector.load %arg5[%c19, %c0_66, %c0_67] : memref<27x8x4xbf16, #tpu.memory_space<vmem>>, vector<1x8x4xbf16>
    %104 = vector.shape_cast %103 : vector<1x8x4xbf16> to vector<8x4xbf16>
    %cst_68 = arith.constant dense<0.000000e+00> : vector<8x128xf32>
    %105 = tpu.matmul %104, %102, %cst_68 {dimension_numbers = #tpu.dot_dimension_numbers<[1], [0], [0], [1], [0, 0, 1, 1], [], []>} : vector<8x4xbf16>, vector<4x128xbf16>, vector<8x128xf32> -> vector<8x128xf32>
    %106 = arith.addf %101, %105 : vector<8x128xf32>
    %107 = vector.extract_strided_slice %5 {offsets = [0, 2], sizes = [4, 128], strides = [1, 1]} : vector<4x256xbf16> to vector<4x128xbf16>
    %c20 = arith.constant 20 : index
    %c0_69 = arith.constant 0 : index
    %c0_70 = arith.constant 0 : index
    %108 = vector.load %arg5[%c20, %c0_69, %c0_70] : memref<27x8x4xbf16, #tpu.memory_space<vmem>>, vector<1x8x4xbf16>
    %109 = vector.shape_cast %108 : vector<1x8x4xbf16> to vector<8x4xbf16>
    %cst_71 = arith.constant dense<0.000000e+00> : vector<8x128xf32>
    %110 = tpu.matmul %109, %107, %cst_71 {dimension_numbers = #tpu.dot_dimension_numbers<[1], [0], [0], [1], [0, 0, 1, 1], [], []>} : vector<8x4xbf16>, vector<4x128xbf16>, vector<8x128xf32> -> vector<8x128xf32>
    %111 = arith.addf %106, %110 : vector<8x128xf32>
    %112 = vector.extract_strided_slice %5 {offsets = [0, 10], sizes = [4, 128], strides = [1, 1]} : vector<4x256xbf16> to vector<4x128xbf16>
    %c21 = arith.constant 21 : index
    %c0_72 = arith.constant 0 : index
    %c0_73 = arith.constant 0 : index
    %113 = vector.load %arg5[%c21, %c0_72, %c0_73] : memref<27x8x4xbf16, #tpu.memory_space<vmem>>, vector<1x8x4xbf16>
    %114 = vector.shape_cast %113 : vector<1x8x4xbf16> to vector<8x4xbf16>
    %cst_74 = arith.constant dense<0.000000e+00> : vector<8x128xf32>
    %115 = tpu.matmul %114, %112, %cst_74 {dimension_numbers = #tpu.dot_dimension_numbers<[1], [0], [0], [1], [0, 0, 1, 1], [], []>} : vector<8x4xbf16>, vector<4x128xbf16>, vector<8x128xf32> -> vector<8x128xf32>
    %116 = arith.addf %111, %115 : vector<8x128xf32>
    %117 = vector.extract_strided_slice %5 {offsets = [0, 11], sizes = [4, 128], strides = [1, 1]} : vector<4x256xbf16> to vector<4x128xbf16>
    %c22 = arith.constant 22 : index
    %c0_75 = arith.constant 0 : index
    %c0_76 = arith.constant 0 : index
    %118 = vector.load %arg5[%c22, %c0_75, %c0_76] : memref<27x8x4xbf16, #tpu.memory_space<vmem>>, vector<1x8x4xbf16>
    %119 = vector.shape_cast %118 : vector<1x8x4xbf16> to vector<8x4xbf16>
    %cst_77 = arith.constant dense<0.000000e+00> : vector<8x128xf32>
    %120 = tpu.matmul %119, %117, %cst_77 {dimension_numbers = #tpu.dot_dimension_numbers<[1], [0], [0], [1], [0, 0, 1, 1], [], []>} : vector<8x4xbf16>, vector<4x128xbf16>, vector<8x128xf32> -> vector<8x128xf32>
    %121 = arith.addf %116, %120 : vector<8x128xf32>
    %122 = vector.extract_strided_slice %5 {offsets = [0, 12], sizes = [4, 128], strides = [1, 1]} : vector<4x256xbf16> to vector<4x128xbf16>
    %c23 = arith.constant 23 : index
    %c0_78 = arith.constant 0 : index
    %c0_79 = arith.constant 0 : index
    %123 = vector.load %arg5[%c23, %c0_78, %c0_79] : memref<27x8x4xbf16, #tpu.memory_space<vmem>>, vector<1x8x4xbf16>
    %124 = vector.shape_cast %123 : vector<1x8x4xbf16> to vector<8x4xbf16>
    %cst_80 = arith.constant dense<0.000000e+00> : vector<8x128xf32>
    %125 = tpu.matmul %124, %122, %cst_80 {dimension_numbers = #tpu.dot_dimension_numbers<[1], [0], [0], [1], [0, 0, 1, 1], [], []>} : vector<8x4xbf16>, vector<4x128xbf16>, vector<8x128xf32> -> vector<8x128xf32>
    %126 = arith.addf %121, %125 : vector<8x128xf32>
    %127 = vector.extract_strided_slice %5 {offsets = [0, 20], sizes = [4, 128], strides = [1, 1]} : vector<4x256xbf16> to vector<4x128xbf16>
    %c24 = arith.constant 24 : index
    %c0_81 = arith.constant 0 : index
    %c0_82 = arith.constant 0 : index
    %128 = vector.load %arg5[%c24, %c0_81, %c0_82] : memref<27x8x4xbf16, #tpu.memory_space<vmem>>, vector<1x8x4xbf16>
    %129 = vector.shape_cast %128 : vector<1x8x4xbf16> to vector<8x4xbf16>
    %cst_83 = arith.constant dense<0.000000e+00> : vector<8x128xf32>
    %130 = tpu.matmul %129, %127, %cst_83 {dimension_numbers = #tpu.dot_dimension_numbers<[1], [0], [0], [1], [0, 0, 1, 1], [], []>} : vector<8x4xbf16>, vector<4x128xbf16>, vector<8x128xf32> -> vector<8x128xf32>
    %131 = arith.addf %126, %130 : vector<8x128xf32>
    %132 = vector.extract_strided_slice %5 {offsets = [0, 21], sizes = [4, 128], strides = [1, 1]} : vector<4x256xbf16> to vector<4x128xbf16>
    %c25 = arith.constant 25 : index
    %c0_84 = arith.constant 0 : index
    %c0_85 = arith.constant 0 : index
    %133 = vector.load %arg5[%c25, %c0_84, %c0_85] : memref<27x8x4xbf16, #tpu.memory_space<vmem>>, vector<1x8x4xbf16>
    %134 = vector.shape_cast %133 : vector<1x8x4xbf16> to vector<8x4xbf16>
    %cst_86 = arith.constant dense<0.000000e+00> : vector<8x128xf32>
    %135 = tpu.matmul %134, %132, %cst_86 {dimension_numbers = #tpu.dot_dimension_numbers<[1], [0], [0], [1], [0, 0, 1, 1], [], []>} : vector<8x4xbf16>, vector<4x128xbf16>, vector<8x128xf32> -> vector<8x128xf32>
    %136 = arith.addf %131, %135 : vector<8x128xf32>
    %137 = vector.extract_strided_slice %5 {offsets = [0, 22], sizes = [4, 128], strides = [1, 1]} : vector<4x256xbf16> to vector<4x128xbf16>
    %c26 = arith.constant 26 : index
    %c0_87 = arith.constant 0 : index
    %c0_88 = arith.constant 0 : index
    %138 = vector.load %arg5[%c26, %c0_87, %c0_88] : memref<27x8x4xbf16, #tpu.memory_space<vmem>>, vector<1x8x4xbf16>
    %139 = vector.shape_cast %138 : vector<1x8x4xbf16> to vector<8x4xbf16>
    %cst_89 = arith.constant dense<0.000000e+00> : vector<8x128xf32>
    %140 = tpu.matmul %139, %137, %cst_89 {dimension_numbers = #tpu.dot_dimension_numbers<[1], [0], [0], [1], [0, 0, 1, 1], [], []>} : vector<8x4xbf16>, vector<4x128xbf16>, vector<8x128xf32> -> vector<8x128xf32>
    %141 = arith.addf %136, %140 : vector<8x128xf32>
    %142 = arith.truncf %141 : vector<8x128xf32> to vector<8x128xbf16>
    %c0_90 = arith.constant 0 : index
    %c0_91 = arith.constant 0 : index
    %c0_92 = arith.constant 0 : index
    %143 = vector.load %arg7[%c0_90, %c0_91, %c0_92] : memref<1x8x128xbf16, #tpu.memory_space<vmem>>, vector<1x8x128xbf16>
    %144 = vector.shape_cast %143 : vector<1x8x128xbf16> to vector<8x128xbf16>
    %145 = vector.shape_cast %142 : vector<8x128xbf16> to vector<1x8x128xbf16>
    tpu.vector_store %arg7[%c0_90, %c0_91, %c0_92], %145 {strides = array<i32>} : memref<1x8x128xbf16, #tpu.memory_space<vmem>>, vector<1x8x128xbf16>,
    %c0_93 = arith.constant 0 : index
    %c0_94 = arith.constant 0 : index
    %146 = vector.load %arg6[%c0_93, %c0_94] : memref<1x128xf32, #tpu.memory_space<vmem>>, vector<1x128xf32>
    %147 = vector.broadcast %146 : vector<1x128xf32> to vector<8x128xf32>
    %148 = arith.mulf %141, %147 : vector<8x128xf32>
    %cst_95 = arith.constant dense<0.000000e+00> : vector<8xf32>
    %149 = vector.multi_reduction <add>, %148, %cst_95 [1] : vector<8x128xf32> to vector<8xf32>
    %150 = vector.shape_cast %149 : vector<8xf32> to vector<8x1xf32>
    %151 = vector.shape_cast %150 : vector<8x1xf32> to vector<1x1x8x1xf32>
    %c0_96 = arith.constant 0 : index
    %c0_97 = arith.constant 0 : index
    %c0_98 = arith.constant 0 : index
    %c0_99 = arith.constant 0 : index
    %152 = vector.load %arg8[%c0_96, %c0_97, %c0_98, %c0_99] : memref<1x1x8x1xf32, #tpu.memory_space<vmem>>, vector<1x1x8x1xf32>
    tpu.vector_store %arg8[%c0_96, %c0_97, %c0_98, %c0_99], %151 {strides = array<i32>} : memref<1x1x8x1xf32, #tpu.memory_space<vmem>>, vector<1x1x8x1xf32>,
    %153 = arith.mulf %148, %148 : vector<8x128xf32>
    %cst_100 = arith.constant dense<0.000000e+00> : vector<8xf32>
    %154 = vector.multi_reduction <add>, %153, %cst_100 [1] : vector<8x128xf32> to vector<8xf32>
    %155 = vector.shape_cast %154 : vector<8xf32> to vector<8x1xf32>
    %156 = vector.shape_cast %155 : vector<8x1xf32> to vector<1x1x8x1xf32>
    %c0_101 = arith.constant 0 : index
    %c0_102 = arith.constant 0 : index
    %c0_103 = arith.constant 0 : index
    %c0_104 = arith.constant 0 : index
    %157 = vector.load %arg9[%c0_101, %c0_102, %c0_103, %c0_104] : memref<1x1x8x1xf32, #tpu.memory_space<vmem>>, vector<1x1x8x1xf32>
    tpu.vector_store %arg9[%c0_101, %c0_102, %c0_103, %c0_104], %156 {strides = array<i32>} : memref<1x1x8x1xf32, #tpu.memory_space<vmem>>, vector<1x1x8x1xf32>,
    return
  }
  func.func @transform_0(%arg0: i32, %arg1: i32) -> (i32, i32, i32) {
    %c8_i32 = arith.constant 8 : i32
    %0 = arith.muli %arg0, %c8_i32 : i32
    %1 = arith.addi %0, %arg1 : i32
    %c0_i32 = arith.constant 0 : i32
    %2 = arith.addi %1, %c0_i32 : i32
    %c0_i32_0 = arith.constant 0 : i32
    %c0_i32_1 = arith.constant 0 : i32
    %c0_i32_2 = arith.constant 0 : i32
    return %2, %c0_i32_0, %c0_i32_1 : i32, i32, i32
  }
  func.func @transform_1(%arg0: i32, %arg1: i32) -> (i32, i32, i32) {
    %c8_i32 = arith.constant 8 : i32
    %0 = arith.muli %arg0, %c8_i32 : i32
    %1 = arith.addi %0, %arg1 : i32
    %c1_i32 = arith.constant 1 : i32
    %2 = arith.addi %1, %c1_i32 : i32
    %c0_i32 = arith.constant 0 : i32
    %c0_i32_0 = arith.constant 0 : i32
    %c0_i32_1 = arith.constant 0 : i32
    return %2, %c0_i32, %c0_i32_0 : i32, i32, i32
  }
  func.func @transform_2(%arg0: i32, %arg1: i32) -> (i32, i32, i32) {
    %c8_i32 = arith.constant 8 : i32
    %0 = arith.muli %arg0, %c8_i32 : i32
    %1 = arith.addi %0, %arg1 : i32
    %c2_i32 = arith.constant 2 : i32
    %2 = arith.addi %1, %c2_i32 : i32
    %c0_i32 = arith.constant 0 : i32
    %c0_i32_0 = arith.constant 0 : i32
    %c0_i32_1 = arith.constant 0 : i32
    return %2, %c0_i32, %c0_i32_0 : i32, i32, i32
  }
  func.func @transform_3(%arg0: i32, %arg1: i32) -> (i32, i32, i32) {
    %c0_i32 = arith.constant 0 : i32
    %c0_i32_0 = arith.constant 0 : i32
    %c0_i32_1 = arith.constant 0 : i32
    %c0_i32_2 = arith.constant 0 : i32
    return %c0_i32, %c0_i32_0, %c0_i32_1 : i32, i32, i32
  }
  func.func @transform_4(%arg0: i32, %arg1: i32) -> (i32, i32) {
    %c0_i32 = arith.constant 0 : i32
    %c0_i32_0 = arith.constant 0 : i32
    %c0_i32_1 = arith.constant 0 : i32
    return %c0_i32, %c0_i32_0 : i32, i32
  }
  func.func @transform_5(%arg0: i32, %arg1: i32) -> (i32, i32, i32) {
    %c0_i32 = arith.constant 0 : i32
    %c0_i32_0 = arith.constant 0 : i32
    return %arg0, %c0_i32, %arg1 : i32, i32, i32
  }
  func.func @transform_6(%arg0: i32, %arg1: i32) -> (i32, i32, i32, i32) {
    %c0_i32 = arith.constant 0 : i32
    %c0_i32_0 = arith.constant 0 : i32
    %c0_i32_1 = arith.constant 0 : i32
    return %arg0, %arg1, %c0_i32, %c0_i32_0 : i32, i32, i32, i32
  }
  func.func @transform_7(%arg0: i32, %arg1: i32) -> (i32, i32, i32, i32) {
    %c0_i32 = arith.constant 0 : i32
    %c0_i32_0 = arith.constant 0 : i32
    %c0_i32_1 = arith.constant 0 : i32
    return %arg0, %arg1, %c0_i32, %c0_i32_0 : i32, i32, i32, i32
  }
}

module attributes {stable_mosaic.version = 11 : i64} {
  func.func @bn_act_kernel(%arg0: i32, %arg1: i32, %arg2: memref<1x8x128xbf16, #tpu.memory_space<vmem>>, %arg3: memref<8x3xf32, #tpu.memory_space<vmem>>, %arg4: memref<1x8x128xf32, #tpu.memory_space<vmem>>) attributes {dimension_semantics = [#tpu.dimension_semantics<parallel>, #tpu.dimension_semantics<parallel>], iteration_bounds = array<i64: 2, 6>, scalar_prefetch = 0 : i64, scratch_operands = 0 : i64, tpu.core_type = #tpu.core_type<tc>, window_params = [{transform_indices = @transform_0, window_bounds = array<i64: 1, 8, 128>}, {pipeline_mode = #tpu.pipeline_mode<synchronous>, transform_indices = @transform_1, window_bounds = array<i64: 8, 3>}, {transform_indices = @transform_2, window_bounds = array<i64: 1, 8, 128>}]} {
    %c0 = arith.constant 0 : index
    %c0_0 = arith.constant 0 : index
    %0 = vector.load %arg3[%c0, %c0_0] : memref<8x3xf32, #tpu.memory_space<vmem>>, vector<8x1xf32>
    %c0_1 = arith.constant 0 : index
    %c1 = arith.constant 1 : index
    %1 = vector.load %arg3[%c0_1, %c1] : memref<8x3xf32, #tpu.memory_space<vmem>>, vector<8x1xf32>
    %c0_2 = arith.constant 0 : index
    %c0_3 = arith.constant 0 : index
    %c0_4 = arith.constant 0 : index
    %2 = vector.load %arg2[%c0_2, %c0_3, %c0_4] : memref<1x8x128xbf16, #tpu.memory_space<vmem>>, vector<1x8x128xbf16>
    %3 = vector.shape_cast %2 : vector<1x8x128xbf16> to vector<8x128xbf16>
    %4 = arith.extf %3 : vector<8x128xbf16> to vector<8x128xf32>
    %5 = vector.broadcast %0 : vector<8x1xf32> to vector<8x128xf32>
    %6 = arith.mulf %4, %5 : vector<8x128xf32>
    %7 = vector.broadcast %1 : vector<8x1xf32> to vector<8x128xf32>
    %8 = arith.addf %6, %7 : vector<8x128xf32>
    %cst = arith.constant 0.000000e+00 : f32
    %9 = vector.broadcast %cst : f32 to vector<8x128xf32>
    %10 = arith.maximumf %8, %9 : vector<8x128xf32>
    %c0_5 = arith.constant 0 : index
    %c0_6 = arith.constant 0 : index
    %c0_7 = arith.constant 0 : index
    %11 = vector.load %arg4[%c0_5, %c0_6, %c0_7] : memref<1x8x128xf32, #tpu.memory_space<vmem>>, vector<1x8x128xf32>
    %12 = vector.shape_cast %11 : vector<1x8x128xf32> to vector<8x128xf32>
    %13 = vector.shape_cast %10 : vector<8x128xf32> to vector<1x8x128xf32>
    tpu.vector_store %arg4[%c0_5, %c0_6, %c0_7], %13 {strides = array<i32>} : memref<1x8x128xf32, #tpu.memory_space<vmem>>, vector<1x8x128xf32>,
    return
  }
  func.func @transform_0(%arg0: i32, %arg1: i32) -> (i32, i32, i32) {
    %c0_i32 = arith.constant 0 : i32
    %c0_i32_0 = arith.constant 0 : i32
    return %arg0, %c0_i32, %arg1 : i32, i32, i32
  }
  func.func @transform_1(%arg0: i32, %arg1: i32) -> (i32, i32) {
    %c0_i32 = arith.constant 0 : i32
    %c0_i32_0 = arith.constant 0 : i32
    %c0_i32_1 = arith.constant 0 : i32
    return %c0_i32, %c0_i32_0 : i32, i32
  }
  func.func @transform_2(%arg0: i32, %arg1: i32) -> (i32, i32, i32) {
    %c0_i32 = arith.constant 0 : i32
    %c0_i32_0 = arith.constant 0 : i32
    return %arg0, %c0_i32, %arg1 : i32, i32, i32
  }
}

</mosaic_0001>

<llo_original>
// kernel: luconv_forward.3
$region0: #{luconv_forward.3}
  #allocation0 [shape = 'u32[]', space=smem, size = 0x4, offset = 0x4, fixed_abs, tag = 'smem constant byte address 0x4 - core index']
  #allocation1 [shape = 'u32[144,128]{1,0:T(1,128)}', space=vmem, size = 0x12000, scoped, tag = 'internal scratch']
  %s0 = inlined_call_operand.vmem [shape: bf16[2,8,768], index: 0, kind: input, shape index: {}]
  %s1 = inlined_call_operand.vmem [shape: f32[8,3], index: 1, kind: input, shape index: {}]
  %s2 = inlined_call_operand.vmem [shape: f32[2,8,768], index: 2, kind: output, shape index: {}]
  %s3 = sld [smem:[#allocation0]]
  $region41: #{luconv_forward.3} parent=0
    _
  %s5 = ssub.s32 1, %s3
  %s6 = scalar_select 0, %s5, %s3
  loop: start=0, step=1, limit=14
  $region2: #{luconv_forward.3} parent=0 // loop_pre_header
    _
  $region3: #{luconv_forward.3} parent=0 // loop_header
    %s8 = sphi 0, %s12
    %p9 = scmp.ge.s32.totalorder %s8, 14
    %s15 = sphi 0, %s27
    %s16 = sphi 0, %s23
    %s17 = sphi 0, %s15
    %s18 = sphi 0, %s16
    %s19 = sphi 0, %s17
    %s20 = sphi 0, %s18
    %s32 = sphi 0, %s34
    %s35 = sphi 0, %s32
    %s36 = sphi 0, %s35
    %s52 = sphi 0, %s36
    %s56 = sphi 0, %s56
    %s58 = sphi 0, %s56
    %s59 = sphi 0, %s58
    %s73 = sphi 0, %s59
    %s81 = sphi 0, %s83
    %s84 = sphi 0, %s81
    %s85 = sphi 0, %s84
    %s101 = sphi 0, %s85
  $region4: #{luconv_forward.3} parent=0 // loop_header_branch
    %11 = sbr.rel (%p9) target = $region8
  $region5: #{luconv_forward.3} parent=0 // loop_body
    %s13 = ssub.s32 %s8, 1
    %s14 = ssub.s32 %s8, 2
    %s21 = sadd.s32 1, %s16
    %p22 = scmp.ge.s32.totalorder %s21, 6
    %s23 = scalar_select %p22, 0, %s21
    %s24 = sadd.s32 1, %s15
    %s25 = scalar_select %p22, %s24, %s15
    %p26 = scmp.ge.s32.totalorder %s25, 2
    %s27 = scalar_select %p26, 0, %s25
    %s28 = ssub.s32 %s15, %s27
    %s29 = ssub.s32 %s16, %s23
    %s30 = sor.u32 %s28, %s29
    %p31 = scmp.eq.s32.totalorder %s30, 0
    %s33 = sadd.s32 %s32, 1
    %s34 = scalar_select %p31, %s32, %s33
    %p37 = pneg %p31
    %p38 = scmp.eq.s32.totalorder %s8, 11
    %p39 = por %p37, %p38
    %p40 = scmp.ne.s32.totalorder %s32, %s35
    %p41 = scmp.eq.s32.totalorder %s8, 0
    %p42 = por %p40, %p41
    %p43 = scmp.ne.s32.totalorder %s32, %s35
    %p44 = scmp.eq.s32.totalorder %s13, 11
    %p45 = por %p43, %p44
    %p46 = scmp.ne.s32.totalorder %s35, %s36
    %p47 = scmp.eq.s32.totalorder %s13, 0
    %p48 = por %p46, %p47
    %p49 = scmp.ne.s32.totalorder %s35, %s36
    %p50 = scmp.eq.s32.totalorder %s14, 11
    %p51 = por %p49, %p50
    %p53 = scmp.ne.s32.totalorder %s36, %s52
    %p54 = scmp.eq.s32.totalorder %s14, 0
    %p55 = por %p53, %p54
    %s57 = sadd.s32 %s56, 1
    %p60 = scmp.eq.s32.totalorder %s8, 11
    %p61 = scmp.ne.s32.totalorder %s56, %s58
    %p62 = scmp.eq.s32.totalorder %s8, 0
    %p63 = por %p61, %p62
    %p64 = scmp.ne.s32.totalorder %s56, %s58
    %p65 = scmp.eq.s32.totalorder %s13, 11
    %p66 = por %p64, %p65
    %p67 = scmp.ne.s32.totalorder %s58, %s59
    %p68 = scmp.eq.s32.totalorder %s13, 0
    %p69 = por %p67, %p68
    %p70 = scmp.ne.s32.totalorder %s58, %s59
    %p71 = scmp.eq.s32.totalorder %s14, 11
    %p72 = por %p70, %p71
    %p74 = scmp.ne.s32.totalorder %s59, %s73
    %p75 = scmp.eq.s32.totalorder %s14, 0
    %p76 = por %p74, %p75
    %s77 = ssub.s32 %s15, %s27
    %s78 = ssub.s32 %s16, %s23
    %s79 = sor.u32 %s77, %s78
    %p80 = scmp.eq.s32.totalorder %s79, 0
    %s82 = sadd.s32 %s81, 1
    %s83 = scalar_select %p80, %s81, %s82
    %p86 = pneg %p80
    %p87 = scmp.eq.s32.totalorder %s8, 11
    %p88 = por %p86, %p87
    %p89 = scmp.ne.s32.totalorder %s81, %s84
    %p90 = scmp.eq.s32.totalorder %s8, 0
    %p91 = por %p89, %p90
    %p92 = scmp.ne.s32.totalorder %s81, %s84
    %p93 = scmp.eq.s32.totalorder %s13, 11
    %p94 = por %p92, %p93
    %p95 = scmp.ne.s32.totalorder %s84, %s85
    %p96 = scmp.eq.s32.totalorder %s13, 0
    %p97 = por %p95, %p96
    %p98 = scmp.ne.s32.totalorder %s84, %s85
    %p99 = scmp.eq.s32.totalorder %s14, 11
    %p100 = por %p98, %p99
    %p102 = scmp.ne.s32.totalorder %s85, %s101
    %p103 = scmp.eq.s32.totalorder %s14, 0
    %p104 = por %p102, %p103
    %p105 = scmp.le.s32.totalorder 1, %s8
    %p106 = scmp.lt.s32.totalorder %s8, 13
    %p107 = pnand %p105, %p106
    %p108 = pneg %p107
    // Predicated region
    $region9: #{luconv_forward.3} parent=5 // pred_check
      _
    $region10: #{luconv_forward.3} parent=5 // pred_check_branch
      %110 = sbr.rel (%p107) target = $region12
    $region11: #{luconv_forward.3} parent=5 // pred_region
      %s111 = ssub.s32 %s8, 1
      // Predicated region
      $region13: #{luconv_forward.3} parent=11 // pred_check
        %p112 = pneg %p69
      $region14: #{luconv_forward.3} parent=11 // pred_check_branch
        %114 = sbr.rel (%p112) target = $region16
      $region15: #{luconv_forward.3} parent=11 // pred_region
        _
      $region16: #{luconv_forward.3} parent=11 // pred_fallthru
        _
    $region12: #{luconv_forward.3} parent=5 // pred_fallthru
      _
    %p115 = scmp.lt.s32.totalorder %s8, 12
    // Predicated region
    $region17: #{luconv_forward.3} parent=5 // pred_check
      %p116 = pneg %p115
    $region18: #{luconv_forward.3} parent=5 // pred_check_branch
      %118 = sbr.rel (%p116) target = $region20
    $region19: #{luconv_forward.3} parent=5 // pred_region
      // Predicated region
      $region21: #{luconv_forward.3} parent=19 // pred_check
        %p119 = pneg %p42
      $region22: #{luconv_forward.3} parent=19 // pred_check_branch
        %121 = sbr.rel (%p119) target = $region24
      $region23: #{luconv_forward.3} parent=19 // pred_region
        %p122 = scmp.lt.s32.totalorder %s15, 1
        %s123 = scalar_select %p122, %s15, 1
        %p124 = scmp.lt.s32.totalorder %s16, 5
        %s125 = scalar_select %p124, %s16, 5
        %s126 = smul.addr %s123, 6
        %s127 = sadd.s32 %s125, %s126
        %s128 = smul.addr %s127, 4
        %s129 = scalar_lea.vmem %s0, %s128
      $region24: #{luconv_forward.3} parent=19 // pred_fallthru
        _
    $region20: #{luconv_forward.3} parent=5 // pred_fallthru
      _
    %p130 = scmp.le.s32.totalorder 1, %s8
    %p131 = scmp.lt.s32.totalorder %s8, 13
    %p132 = pnand %p130, %p131
    %p133 = pneg %p132
    // Predicated region
    $region25: #{luconv_forward.3} parent=5 // pred_check
      _
    $region26: #{luconv_forward.3} parent=5 // pred_check_branch
      %135 = sbr.rel (%p132) target = $region28
    $region27: #{luconv_forward.3} parent=5 // pred_region
      %s136 = ssub.s32 %s8, 1
      %p137 = scmp.lt.s32.totalorder %s17, 1
      %s138 = scalar_select %p137, %s17, 1
      %p139 = scmp.lt.s32.totalorder %s18, 5
      %s140 = scalar_select %p139, %s18, 5
      %s141 = smul.addr %s138, 6
      %s142 = sadd.s32 %s140, %s141
      %s143 = smul.addr %s142, 4
      %s144 = scalar_lea.vmem %s0, %s143
      %p145 = pneg %p48
      %p146 = pneg %p45
      %p147 = pneg %p69
      %p148 = pneg %p66
      %p149 = pneg %p97
      %p150 = pneg %p94
      %p151 = scmp.lt.s32.totalorder %s17, 1
      %s152 = scalar_select %p151, %s17, 1
      %p153 = scmp.lt.s32.totalorder %s18, 5
      %s154 = scalar_select %p153, %s18, 5
      %s155 = smul.addr %s152, 6
      %s156 = sadd.s32 %s154, %s155
      %s157 = smul.addr %s156, 8
      %s158 = scalar_lea.vmem %s2, %s157
      %p159 = scmp.lt.s32.totalorder %s17, 1
      %s160 = scalar_select %p159, %s17, 1
      %p161 = scmp.lt.s32.totalorder %s18, 5
      %s162 = scalar_select %p161, %s18, 5
      %s163 = smul.addr %s160, 6
      %s164 = sadd.s32 %s162, %s163
      %s165 = smul.addr %s164, 4
      %s166 = scalar_lea.vmem %s0, %s165
      %p167 = scmp.lt.s32.totalorder %s17, 1
      %s168 = scalar_select %p167, %s17, 1
      %p169 = scmp.lt.s32.totalorder %s18, 5
      %s170 = scalar_select %p169, %s18, 5
      %s171 = smul.addr %s168, 6
      %s172 = sadd.s32 %s170, %s171
      %s173 = smul.addr %s172, 8
      %s174 = scalar_lea.vmem %s2, %s173
      %v175 = vld [vmem:[%s1] sm:$0xff]
      %v176 = vld [vmem:[%s166] sm:$0xf]
      %v177 = vunpack.c.l.bf16 %v176
      %179 = vset.pattern.permute.xlu0 0
      %180 = vperm.xlu0 %179, %v175
      %v181 = vpop.permute.xlu0 %180
      %v183 = vmul.f32 %v177, %v181
      %184 = vset.pattern.permute.xlu0 1
      %185 = vperm.xlu0 %184, %v175
      %v186 = vpop.permute.xlu0 %185
      %v188 = vadd.f32 %v183, %v186
      %v189 = vmax.f32 %v188, 0.0
      %190 = vst [vmem:[%s174] sm:$0xff] %v189
      %p191 = scmp.lt.s32.totalorder %s17, 1
      %s192 = scalar_select %p191, %s17, 1
      %p193 = scmp.lt.s32.totalorder %s18, 5
      %s194 = scalar_select %p193, %s18, 5
      %s195 = smul.addr %s192, 6
      %s196 = sadd.s32 %s194, %s195
      %s197 = smul.addr %s196, 8
      %s198 = scalar_lea.vmem %s2, %s197
      // Predicated region
      $region29: #{luconv_forward.3} parent=27 // pred_check
        %p199 = pneg %p94
      $region30: #{luconv_forward.3} parent=27 // pred_check_branch
        %201 = sbr.rel (%p199) target = $region32
      $region31: #{luconv_forward.3} parent=27 // pred_region
        _
      $region32: #{luconv_forward.3} parent=27 // pred_fallthru
        _
    $region28: #{luconv_forward.3} parent=5 // pred_fallthru
      _
    %p202 = scmp.le.s32.totalorder 2, %s8
    // Predicated region
    $region33: #{luconv_forward.3} parent=5 // pred_check
      %p203 = pneg %p202
    $region34: #{luconv_forward.3} parent=5 // pred_check_branch
      %205 = sbr.rel (%p203) target = $region36
    $region35: #{luconv_forward.3} parent=5 // pred_region
      %s206 = ssub.s32 %s8, 2
      // Predicated region
      $region37: #{luconv_forward.3} parent=35 // pred_check
        %p207 = pneg %p100
      $region38: #{luconv_forward.3} parent=35 // pred_check_branch
        %209 = sbr.rel (%p207) target = $region40
      $region39: #{luconv_forward.3} parent=35 // pred_region
        %p210 = scmp.lt.s32.totalorder %s19, 1
        %s211 = scalar_select %p210, %s19, 1
        %p212 = scmp.lt.s32.totalorder %s20, 5
        %s213 = scalar_select %p212, %s20, 5
        %s214 = smul.addr %s211, 6
        %s215 = sadd.s32 %s213, %s214
        %s216 = smul.addr %s215, 8
        %s217 = scalar_lea.vmem %s2, %s216
      $region40: #{luconv_forward.3} parent=35 // pred_fallthru
        _
    $region36: #{luconv_forward.3} parent=5 // pred_fallthru
      _
  $region6: #{luconv_forward.3} parent=0 // loop_footer
    %s12 = sadd.s32 1, %s8
  $region7: #{luconv_forward.3} parent=0 // loop_footer_branch
    %7 = sbr.rel target = $region3
  $region8: #{luconv_forward.3} parent=0 // loop_exit
    _

// kernel: luconv_forward.2
$region0: #{luconv_forward.2}
  #allocation0 [shape = 'u32[]', space=smem, size = 0x4, offset = 0x4, fixed_abs, tag = 'smem constant byte address 0x4 - core index']
  #allocation1 [shape = 'u32[144,128]{1,0:T(1,128)}', space=vmem, size = 0x12000, scoped, tag = 'internal scratch']
  %s0 = inlined_call_operand.vmem [shape: bf16[16,4,256], index: 0, kind: input, shape index: {}, may-alias: {0,1,2}]
  %s1 = inlined_call_operand.vmem [shape: bf16[16,4,256], index: 1, kind: input, shape index: {}, may-alias: {0,1,2}]
  %s2 = inlined_call_operand.vmem [shape: bf16[16,4,256], index: 2, kind: input, shape index: {}, may-alias: {0,1,2}]
  %s3 = inlined_call_operand.vmem [shape: bf16[27,8,4], index: 3, kind: input, shape index: {}]
  %s4 = inlined_call_operand.vmem [shape: f32[1,128], index: 4, kind: input, shape index: {}]
  %s5 = inlined_call_operand.vmem [shape: bf16[2,8,768], index: 5, kind: output, shape index: {0}]
  %s6 = inlined_call_operand.vmem [shape: f32[2,6,8,1], index: 6, kind: output, shape index: {1}]
  %s7 = inlined_call_operand.vmem [shape: f32[2,6,8,1], index: 7, kind: output, shape index: {2}]
  %8 = xla_tuple %s5, %s6, %s7
  %s9 = sld [smem:[#allocation0]]
  $region69: #{luconv_forward.2} parent=0
    _
  %s11 = ssub.s32 1, %s9
  %s12 = scalar_select 0, %s11, %s9
  loop: start=0, step=1, limit=14
  $region2: #{luconv_forward.2} parent=0 // loop_pre_header
    _
  $region3: #{luconv_forward.2} parent=0 // loop_header
    %s14 = sphi 0, %s18
    %p15 = scmp.ge.s32.totalorder %s14, 14
    %s21 = sphi 0, %s33
    %s22 = sphi 0, %s29
    %s23 = sphi 0, %s21
    %s24 = sphi 0, %s22
    %s25 = sphi 0, %s23
    %s26 = sphi 0, %s24
    %s40 = sphi 0, %s42
    %s43 = sphi 0, %s40
    %s44 = sphi 0, %s43
    %s60 = sphi 0, %s44
    %s72 = sphi 0, %s74
    %s75 = sphi 0, %s72
    %s76 = sphi 0, %s75
    %s92 = sphi 0, %s76
    %s104 = sphi 0, %s106
    %s107 = sphi 0, %s104
    %s108 = sphi 0, %s107
    %s124 = sphi 0, %s108
    %s128 = sphi 0, %s128
    %s130 = sphi 0, %s128
    %s131 = sphi 0, %s130
    %s145 = sphi 0, %s131
    %s149 = sphi 0, %s149
    %s151 = sphi 0, %s149
    %s152 = sphi 0, %s151
    %s166 = sphi 0, %s152
    %s174 = sphi 0, %s176
    %s177 = sphi 0, %s174
    %s178 = sphi 0, %s177
    %s194 = sphi 0, %s178
    %s202 = sphi 0, %s204
    %s205 = sphi 0, %s202
    %s206 = sphi 0, %s205
    %s222 = sphi 0, %s206
    %s230 = sphi 0, %s232
    %s233 = sphi 0, %s230
    %s234 = sphi 0, %s233
    %s250 = sphi 0, %s234
  $region4: #{luconv_forward.2} parent=0 // loop_header_branch
    %17 = sbr.rel (%p15) target = $region8
  $region5: #{luconv_forward.2} parent=0 // loop_body
    %s19 = ssub.s32 %s14, 1
    %s20 = ssub.s32 %s14, 2
    %s27 = sadd.s32 1, %s22
    %p28 = scmp.ge.s32.totalorder %s27, 6
    %s29 = scalar_select %p28, 0, %s27
    %s30 = sadd.s32 1, %s21
    %s31 = scalar_select %p28, %s30, %s21
    %p32 = scmp.ge.s32.totalorder %s31, 2
    %s33 = scalar_select %p32, 0, %s31
    %s34 = smul.u32 %s21, 8
    %s35 = sadd.s32 %s34, %s22
    %s36 = smul.u32 %s33, 8
    %s37 = sadd.s32 %s36, %s29
    %s38 = ssub.s32 %s35, %s37
    %p39 = scmp.eq.s32.totalorder %s38, 0
    %s41 = sadd.s32 %s40, 1
    %s42 = scalar_select %p39, %s40, %s41
    %p45 = pneg %p39
    %p46 = scmp.eq.s32.totalorder %s14, 11
    %p47 = por %p45, %p46
    %p48 = scmp.ne.s32.totalorder %s40, %s43
    %p49 = scmp.eq.s32.totalorder %s14, 0
    %p50 = por %p48, %p49
    %p51 = scmp.ne.s32.totalorder %s40, %s43
    %p52 = scmp.eq.s32.totalorder %s19, 11
    %p53 = por %p51, %p52
    %p54 = scmp.ne.s32.totalorder %s43, %s44
    %p55 = scmp.eq.s32.totalorder %s19, 0
    %p56 = por %p54, %p55
    %p57 = scmp.ne.s32.totalorder %s43, %s44
    %p58 = scmp.eq.s32.totalorder %s20, 11
    %p59 = por %p57, %p58
    %p61 = scmp.ne.s32.totalorder %s44, %s60
    %p62 = scmp.eq.s32.totalorder %s20, 0
    %p63 = por %p61, %p62
    %s64 = smul.u32 %s21, 8
    %s65 = sadd.s32 %s64, %s22
    %s66 = sadd.s32 %s65, 1
    %s67 = smul.u32 %s33, 8
    %s68 = sadd.s32 %s67, %s29
    %s69 = sadd.s32 %s68, 1
    %s70 = ssub.s32 %s66, %s69
    %p71 = scmp.eq.s32.totalorder %s70, 0
    %s73 = sadd.s32 %s72, 1
    %s74 = scalar_select %p71, %s72, %s73
    %p77 = pneg %p71
    %p78 = scmp.eq.s32.totalorder %s14, 11
    %p79 = por %p77, %p78
    %p80 = scmp.ne.s32.totalorder %s72, %s75
    %p81 = scmp.eq.s32.totalorder %s14, 0
    %p82 = por %p80, %p81
    %p83 = scmp.ne.s32.totalorder %s72, %s75
    %p84 = scmp.eq.s32.totalorder %s19, 11
    %p85 = por %p83, %p84
    %p86 = scmp.ne.s32.totalorder %s75, %s76
    %p87 = scmp.eq.s32.totalorder %s19, 0
    %p88 = por %p86, %p87
    %p89 = scmp.ne.s32.totalorder %s75, %s76
    %p90 = scmp.eq.s32.totalorder %s20, 11
    %p91 = por %p89, %p90
    %p93 = scmp.ne.s32.totalorder %s76, %s92
    %p94 = scmp.eq.s32.totalorder %s20, 0
    %p95 = por %p93, %p94
    %s96 = smul.u32 %s21, 8
    %s97 = sadd.s32 %s96, %s22
    %s98 = sadd.s32 %s97, 2
    %s99 = smul.u32 %s33, 8
    %s100 = sadd.s32 %s99, %s29
    %s101 = sadd.s32 %s100, 2
    %s102 = ssub.s32 %s98, %s101
    %p103 = scmp.eq.s32.totalorder %s102, 0
    %s105 = sadd.s32 %s104, 1
    %s106 = scalar_select %p103, %s104, %s105
    %p109 = pneg %p103
    %p110 = scmp.eq.s32.totalorder %s14, 11
    %p111 = por %p109, %p110
    %p112 = scmp.ne.s32.totalorder %s104, %s107
    %p113 = scmp.eq.s32.totalorder %s14, 0
    %p114 = por %p112, %p113
    %p115 = scmp.ne.s32.totalorder %s104, %s107
    %p116 = scmp.eq.s32.totalorder %s19, 11
    %p117 = por %p115, %p116
    %p118 = scmp.ne.s32.totalorder %s107, %s108
    %p119 = scmp.eq.s32.totalorder %s19, 0
    %p120 = por %p118, %p119
    %p121 = scmp.ne.s32.totalorder %s107, %s108
    %p122 = scmp.eq.s32.totalorder %s20, 11
    %p123 = por %p121, %p122
    %p125 = scmp.ne.s32.totalorder %s108, %s124
    %p126 = scmp.eq.s32.totalorder %s20, 0
    %p127 = por %p125, %p126
    %s129 = sadd.s32 %s128, 1
    %p132 = scmp.eq.s32.totalorder %s14, 11
    %p133 = scmp.ne.s32.totalorder %s128, %s130
    %p134 = scmp.eq.s32.totalorder %s14, 0
    %p135 = por %p133, %p134
    %p136 = scmp.ne.s32.totalorder %s128, %s130
    %p137 = scmp.eq.s32.totalorder %s19, 11
    %p138 = por %p136, %p137
    %p139 = scmp.ne.s32.totalorder %s130, %s131
    %p140 = scmp.eq.s32.totalorder %s19, 0
    %p141 = por %p139, %p140
    %p142 = scmp.ne.s32.totalorder %s130, %s131
    %p143 = scmp.eq.s32.totalorder %s20, 11
    %p144 = por %p142, %p143
    %p146 = scmp.ne.s32.totalorder %s131, %s145
    %p147 = scmp.eq.s32.totalorder %s20, 0
    %p148 = por %p146, %p147
    %s150 = sadd.s32 %s149, 1
    %p153 = scmp.eq.s32.totalorder %s14, 11
    %p154 = scmp.ne.s32.totalorder %s149, %s151
    %p155 = scmp.eq.s32.totalorder %s14, 0
    %p156 = por %p154, %p155
    %p157 = scmp.ne.s32.totalorder %s149, %s151
    %p158 = scmp.eq.s32.totalorder %s19, 11
    %p159 = por %p157, %p158
    %p160 = scmp.ne.s32.totalorder %s151, %s152
    %p161 = scmp.eq.s32.totalorder %s19, 0
    %p162 = por %p160, %p161
    %p163 = scmp.ne.s32.totalorder %s151, %s152
    %p164 = scmp.eq.s32.totalorder %s20, 11
    %p165 = por %p163, %p164
    %p167 = scmp.ne.s32.totalorder %s152, %s166
    %p168 = scmp.eq.s32.totalorder %s20, 0
    %p169 = por %p167, %p168
    %s170 = ssub.s32 %s21, %s33
    %s171 = ssub.s32 %s22, %s29
    %s172 = sor.u32 %s170, %s171
    %p173 = scmp.eq.s32.totalorder %s172, 0
    %s175 = sadd.s32 %s174, 1
    %s176 = scalar_select %p173, %s174, %s175
    %p179 = pneg %p173
    %p180 = scmp.eq.s32.totalorder %s14, 11
    %p181 = por %p179, %p180
    %p182 = scmp.ne.s32.totalorder %s174, %s177
    %p183 = scmp.eq.s32.totalorder %s14, 0
    %p184 = por %p182, %p183
    %p185 = scmp.ne.s32.totalorder %s174, %s177
    %p186 = scmp.eq.s32.totalorder %s19, 11
    %p187 = por %p185, %p186
    %p188 = scmp.ne.s32.totalorder %s177, %s178
    %p189 = scmp.eq.s32.totalorder %s19, 0
    %p190 = por %p188, %p189
    %p191 = scmp.ne.s32.totalorder %s177, %s178
    %p192 = scmp.eq.s32.totalorder %s20, 11
    %p193 = por %p191, %p192
    %p195 = scmp.ne.s32.totalorder %s178, %s194
    %p196 = scmp.eq.s32.totalorder %s20, 0
    %p197 = por %p195, %p196
    %s198 = ssub.s32 %s21, %s33
    %s199 = ssub.s32 %s22, %s29
    %s200 = sor.u32 %s198, %s199
    %p201 = scmp.eq.s32.totalorder %s200, 0
    %s203 = sadd.s32 %s202, 1
    %s204 = scalar_select %p201, %s202, %s203
    %p207 = pneg %p201
    %p208 = scmp.eq.s32.totalorder %s14, 11
    %p209 = por %p207, %p208
    %p210 = scmp.ne.s32.totalorder %s202, %s205
    %p211 = scmp.eq.s32.totalorder %s14, 0
    %p212 = por %p210, %p211
    %p213 = scmp.ne.s32.totalorder %s202, %s205
    %p214 = scmp.eq.s32.totalorder %s19, 11
    %p215 = por %p213, %p214
    %p216 = scmp.ne.s32.totalorder %s205, %s206
    %p217 = scmp.eq.s32.totalorder %s19, 0
    %p218 = por %p216, %p217
    %p219 = scmp.ne.s32.totalorder %s205, %s206
    %p220 = scmp.eq.s32.totalorder %s20, 11
    %p221 = por %p219, %p220
    %p223 = scmp.ne.s32.totalorder %s206, %s222
    %p224 = scmp.eq.s32.totalorder %s20, 0
    %p225 = por %p223, %p224
    %s226 = ssub.s32 %s21, %s33
    %s227 = ssub.s32 %s22, %s29
    %s228 = sor.u32 %s226, %s227
    %p229 = scmp.eq.s32.totalorder %s228, 0
    %s231 = sadd.s32 %s230, 1
    %s232 = scalar_select %p229, %s230, %s231
    %p235 = pneg %p229
    %p236 = scmp.eq.s32.totalorder %s14, 11
    %p237 = por %p235, %p236
    %p238 = scmp.ne.s32.totalorder %s230, %s233
    %p239 = scmp.eq.s32.totalorder %s14, 0
    %p240 = por %p238, %p239
    %p241 = scmp.ne.s32.totalorder %s230, %s233
    %p242 = scmp.eq.s32.totalorder %s19, 11
    %p243 = por %p241, %p242
    %p244 = scmp.ne.s32.totalorder %s233, %s234
    %p245 = scmp.eq.s32.totalorder %s19, 0
    %p246 = por %p244, %p245
    %p247 = scmp.ne.s32.totalorder %s233, %s234
    %p248 = scmp.eq.s32.totalorder %s20, 11
    %p249 = por %p247, %p248
    %p251 = scmp.ne.s32.totalorder %s234, %s250
    %p252 = scmp.eq.s32.totalorder %s20, 0
    %p253 = por %p251, %p252
    %p254 = scmp.le.s32.totalorder 1, %s14
    %p255 = scmp.lt.s32.totalorder %s14, 13
    %p256 = pnand %p254, %p255
    %p257 = pneg %p256
    // Predicated region
    $region9: #{luconv_forward.2} parent=5 // pred_check
      _
    $region10: #{luconv_forward.2} parent=5 // pred_check_branch
      %259 = sbr.rel (%p256) target = $region12
    $region11: #{luconv_forward.2} parent=5 // pred_region
      %s260 = ssub.s32 %s14, 1
      // Predicated region
      $region13: #{luconv_forward.2} parent=11 // pred_check
        %p261 = pneg %p141
      $region14: #{luconv_forward.2} parent=11 // pred_check_branch
        %263 = sbr.rel (%p261) target = $region16
      $region15: #{luconv_forward.2} parent=11 // pred_region
        _
      $region16: #{luconv_forward.2} parent=11 // pred_fallthru
        _
      // Predicated region
      $region17: #{luconv_forward.2} parent=11 // pred_check
        %p264 = pneg %p162
      $region18: #{luconv_forward.2} parent=11 // pred_check_branch
        %266 = sbr.rel (%p264) target = $region20
      $region19: #{luconv_forward.2} parent=11 // pred_region
        _
      $region20: #{luconv_forward.2} parent=11 // pred_fallthru
        _
    $region12: #{luconv_forward.2} parent=5 // pred_fallthru
      _
    %p267 = scmp.lt.s32.totalorder %s14, 12
    // Predicated region
    $region21: #{luconv_forward.2} parent=5 // pred_check
      %p268 = pneg %p267
    $region22: #{luconv_forward.2} parent=5 // pred_check_branch
      %270 = sbr.rel (%p268) target = $region24
    $region23: #{luconv_forward.2} parent=5 // pred_region
      // Predicated region
      $region25: #{luconv_forward.2} parent=23 // pred_check
        %p271 = pneg %p50
      $region26: #{luconv_forward.2} parent=23 // pred_check_branch
        %273 = sbr.rel (%p271) target = $region28
      $region27: #{luconv_forward.2} parent=23 // pred_region
        %s274 = smul.u32 %s21, 8
        %s275 = sadd.s32 %s274, %s22
        %p276 = scmp.lt.s32.totalorder %s275, 15
        %s277 = scalar_select %p276, %s275, 15
        %s278 = smul.addr %s277, 2
        %s279 = smul.addr %s278, 2
        %s280 = scalar_lea.vmem %s0, %s279
        %s281 = smul.u32 %s21, 8
        %s282 = sadd.s32 %s281, %s22
      $region28: #{luconv_forward.2} parent=23 // pred_fallthru
        _
      // Predicated region
      $region29: #{luconv_forward.2} parent=23 // pred_check
        %p283 = pneg %p82
      $region30: #{luconv_forward.2} parent=23 // pred_check_branch
        %285 = sbr.rel (%p283) target = $region32
      $region31: #{luconv_forward.2} parent=23 // pred_region
        %s286 = smul.u32 %s21, 8
        %s287 = sadd.s32 %s286, %s22
        %s288 = sadd.s32 %s287, 1
        %p289 = scmp.lt.s32.totalorder %s288, 15
        %s290 = scalar_select %p289, %s288, 15
        %s291 = smul.addr %s290, 2
        %s292 = smul.addr %s291, 2
        %s293 = scalar_lea.vmem %s1, %s292
        %s294 = smul.u32 %s21, 8
        %s295 = sadd.s32 %s294, %s22
        %s296 = sadd.s32 %s295, 1
      $region32: #{luconv_forward.2} parent=23 // pred_fallthru
        _
      // Predicated region
      $region33: #{luconv_forward.2} parent=23 // pred_check
        %p297 = pneg %p114
      $region34: #{luconv_forward.2} parent=23 // pred_check_branch
        %299 = sbr.rel (%p297) target = $region36
      $region35: #{luconv_forward.2} parent=23 // pred_region
        %s300 = smul.u32 %s21, 8
        %s301 = sadd.s32 %s300, %s22
        %s302 = sadd.s32 %s301, 2
        %p303 = scmp.lt.s32.totalorder %s302, 15
        %s304 = scalar_select %p303, %s302, 15
        %s305 = smul.addr %s304, 2
        %s306 = smul.addr %s305, 2
        %s307 = scalar_lea.vmem %s2, %s306
        %s308 = smul.u32 %s21, 8
        %s309 = sadd.s32 %s308, %s22
        %s310 = sadd.s32 %s309, 2
      $region36: #{luconv_forward.2} parent=23 // pred_fallthru
        _
    $region24: #{luconv_forward.2} parent=5 // pred_fallthru
      _
    %p311 = scmp.le.s32.totalorder 1, %s14
    %p312 = scmp.lt.s32.totalorder %s14, 13
    %p313 = pnand %p311, %p312
    %p314 = pneg %p313
    // Predicated region
    $region37: #{luconv_forward.2} parent=5 // pred_check
      _
    $region38: #{luconv_forward.2} parent=5 // pred_check_branch
      %316 = sbr.rel (%p313) target = $region40
    $region39: #{luconv_forward.2} parent=5 // pred_region
      %s317 = ssub.s32 %s14, 1
      %s318 = smul.u32 %s23, 8
      %s319 = sadd.s32 %s318, %s24
      %p320 = scmp.lt.s32.totalorder %s319, 15
      %s321 = scalar_select %p320, %s319, 15
      %s322 = smul.addr %s321, 2
      %s323 = smul.addr %s322, 2
      %s324 = scalar_lea.vmem %s0, %s323
      %p325 = pneg %p56
      %p326 = pneg %p53
      %s327 = smul.u32 %s23, 8
      %s328 = sadd.s32 %s327, %s24
      %s329 = sadd.s32 %s328, 1
      %p330 = scmp.lt.s32.totalorder %s329, 15
      %s331 = scalar_select %p330, %s329, 15
      %s332 = smul.addr %s331, 2
      %s333 = smul.addr %s332, 2
      %s334 = scalar_lea.vmem %s1, %s333
      %p335 = pneg %p88
      %p336 = pneg %p85
      %s337 = smul.u32 %s23, 8
      %s338 = sadd.s32 %s337, %s24
      %s339 = sadd.s32 %s338, 2
      %p340 = scmp.lt.s32.totalorder %s339, 15
      %s341 = scalar_select %p340, %s339, 15
      %s342 = smul.addr %s341, 2
      %s343 = smul.addr %s342, 2
      %s344 = scalar_lea.vmem %s2, %s343
      %p345 = pneg %p120
      %p346 = pneg %p117
      %p347 = pneg %p141
      %p348 = pneg %p138
      %p349 = pneg %p162
      %p350 = pneg %p159
      %p351 = pneg %p190
      %p352 = pneg %p187
      %p353 = scmp.lt.s32.totalorder %s23, 1
      %s354 = scalar_select %p353, %s23, 1
      %p355 = scmp.lt.s32.totalorder %s24, 5
      %s356 = scalar_select %p355, %s24, 5
      %s357 = smul.addr %s354, 6
      %s358 = sadd.s32 %s356, %s357
      %s359 = smul.addr %s358, 4
      %s360 = scalar_lea.vmem %s5, %s359
      %p361 = pneg %p218
      %p362 = pneg %p215
      %p363 = scmp.lt.s32.totalorder %s23, 1
      %s364 = scalar_select %p363, %s23, 1
      %p365 = scmp.lt.s32.totalorder %s24, 5
      %s366 = scalar_select %p365, %s24, 5
      %s367 = smul.addr %s364, 6
      %s368 = sadd.s32 %s366, %s367
      %s369 = smul.addr %s368, 8
      %s370 = scalar_lea.vmem %s6, %s369
      %p371 = pneg %p246
      %p372 = pneg %p243
      %p373 = scmp.lt.s32.totalorder %s23, 1
      %s374 = scalar_select %p373, %s23, 1
      %p375 = scmp.lt.s32.totalorder %s24, 5
      %s376 = scalar_select %p375, %s24, 5
      %s377 = smul.addr %s374, 6
      %s378 = sadd.s32 %s376, %s377
      %s379 = smul.addr %s378, 8
      %s380 = scalar_lea.vmem %s7, %s379
      %s381 = smul.u32 %s23, 8
      %s382 = sadd.s32 %s381, %s24
      %p383 = scmp.lt.s32.totalorder %s382, 15
      %s384 = scalar_select %p383, %s382, 15
      %s385 = smul.addr %s384, 2
      %s386 = smul.addr %s385, 2
      %s387 = scalar_lea.vmem %s0, %s386
      %s388 = smul.u32 %s23, 8
      %s389 = sadd.s32 %s388, %s24
      %s390 = smul.u32 %s23, 8
      %s391 = sadd.s32 %s390, %s24
      %s392 = sadd.s32 %s391, 1
      %p393 = scmp.lt.s32.totalorder %s392, 15
      %s394 = scalar_select %p393, %s392, 15
      %s395 = smul.addr %s394, 2
      %s396 = smul.addr %s395, 2
      %s397 = scalar_lea.vmem %s1, %s396
      %s398 = smul.u32 %s23, 8
      %s399 = sadd.s32 %s398, %s24
      %s400 = sadd.s32 %s399, 1
      %s401 = smul.u32 %s23, 8
      %s402 = sadd.s32 %s401, %s24
      %s403 = sadd.s32 %s402, 2
      %p404 = scmp.lt.s32.totalorder %s403, 15
      %s405 = scalar_select %p404, %s403, 15
      %s406 = smul.addr %s405, 2
      %s407 = smul.addr %s406, 2
      %s408 = scalar_lea.vmem %s2, %s407
      %s409 = smul.u32 %s23, 8
      %s410 = sadd.s32 %s409, %s24
      %s411 = sadd.s32 %s410, 2
      %p412 = scmp.lt.s32.totalorder %s23, 1
      %s413 = scalar_select %p412, %s23, 1
      %p414 = scmp.lt.s32.totalorder %s24, 5
      %s415 = scalar_select %p414, %s24, 5
      %s416 = smul.addr %s413, 6
      %s417 = sadd.s32 %s415, %s416
      %s418 = smul.addr %s417, 4
      %s419 = scalar_lea.vmem %s5, %s418
      %p420 = scmp.lt.s32.totalorder %s23, 1
      %s421 = scalar_select %p420, %s23, 1
      %p422 = scmp.lt.s32.totalorder %s24, 5
      %s423 = scalar_select %p422, %s24, 5
      %s424 = smul.addr %s421, 6
      %s425 = sadd.s32 %s423, %s424
      %s426 = smul.addr %s425, 8
      %s427 = scalar_lea.vmem %s6, %s426
      %p428 = scmp.lt.s32.totalorder %s23, 1
      %s429 = scalar_select %p428, %s23, 1
      %p430 = scmp.lt.s32.totalorder %s24, 5
      %s431 = scalar_select %p430, %s24, 5
      %s432 = smul.addr %s429, 6
      %s433 = sadd.s32 %s431, %s432
      %s434 = smul.addr %s433, 8
      %s435 = scalar_lea.vmem %s7, %s434
      %v437 = vld [vmem:[%s387] sm:$0xf]
      %v438 = vld [vmem:[%s397] sm:$0xf]
      %v439 = vld [vmem:[%s408] sm:$0xf]
      %v440 = vld [vmem:[%s3] sm:$0xf]
      %s441 = scalar_lea.vmem %s3, 4
      %v442 = vld [vmem:[%s441] sm:$0xf]
      %v445 = vunpack.c.l.s4 1983009808
      %v446 = vunpack.c.0.s8 %v445
      %v447 = vlaneseq
      %v448 = vshrl.u32 %v447, 7
      %v449 = vsub.s32 %v446, %v448
      %v450 = vrot.slane %v437, %v449
      %v451 = vcombine.high %v450, %v450
      %452 = vrot.lane.b32.xlu0 %v450, 127
      %v453 = vpop.permute.xlu0 %452
      %454 = vrot.lane.b32.xlu0 %v451, 127
      %v455 = vpop.permute.xlu0 %454
      %vm456 = vcmask 1039360
      %v457 = vsel %vm456, %v453, %v455
      %vm458 = vcmask 31744
      %v460 = vsel %vm458, %v442, 0
      %vm462 = vcmask 1041408
      %v464 = vsel %vm462, %v457, 0
      %466 = vmatprep.subr.bf16.mxu0 0
      %467 = vmatpush1.bf16.msra.mxu0 %v464
      %468 = vmatprep.subr.bf16.mxu0 0
      %469 = vmatpush1.bf16.msra.mxu0 0
      %470 = vmatprep.subr.bf16.mxu0 0
      %471 = vmatpush1.bf16.msra.mxu0 0
      %472 = vmatprep.subr.bf16.mxu0 0
      %473 = vmatpush1.bf16.msra.mxu0 0
      %474 = vmatprep.subr.bf16.mxu0 0
      %475 = vmatpush1.bf16.msra.mxu0 0
      %476 = vmatprep.subr.bf16.mxu0 0
      %477 = vmatpush1.bf16.msra.mxu0 0
      %478 = vmatprep.subr.bf16.mxu0 0
      %479 = vmatpush1.bf16.msra.mxu0 0
      %480 = vmatprep.subr.bf16.mxu0 0
      %481 = vmatpush1.bf16.msra.mxu0 0
      %482 = vmatprep.subr.bf16.mxu0 0
      %483 = vmatpush1.bf16.msra.mxu0 0
      %484 = vmatprep.subr.bf16.mxu0 0
      %485 = vmatpush1.bf16.msra.mxu0 0
      %486 = vmatprep.subr.bf16.mxu0 0
      %487 = vmatpush1.bf16.msra.mxu0 0
      %488 = vmatprep.subr.bf16.mxu0 0
      %489 = vmatpush1.bf16.msra.mxu0 0
      %490 = vmatprep.subr.bf16.mxu0 0
      %491 = vmatpush1.bf16.msra.mxu0 0
      %492 = vmatprep.subr.bf16.mxu0 0
      %493 = vmatpush1.bf16.msra.mxu0 0
      %494 = vmatprep.subr.bf16.mxu0 0
      %495 = vmatpush1.bf16.msra.mxu0 0
      %496 = vmatprep.subr.bf16.mxu0 0
      %497 = vmatpush1.bf16.msra.mxu0 0
      %498 = vmatprep.mubr.bf16.mxu0 0
      %499 = vmatmul.mubr.bf16.gmra.mrb[0].mxu0 %v460
      %v500 = vpop.f32.mrb[0].mxu0
      %v501 = vadd.f32 0.0, %v500
      %v502 = vpop.f32.mrb[0].mxu0
      %v503 = vpop.f32.mrb[0].mxu0
      %v504 = vpop.f32.mrb[0].mxu0
      %505 = vdwg.mxu0
      %v507 = vsel %vm458, %v440, 0
      %v510 = vsel %vm462, %v437, 0
      %512 = vmatprep.subr.bf16.mxu0 0
      %513 = vmatpush1.bf16.msra.mxu0 %v510
      %514 = vmatprep.subr.bf16.mxu0 0
      %515 = vmatpush1.bf16.msra.mxu0 0
      %516 = vmatprep.subr.bf16.mxu0 0
      %517 = vmatpush1.bf16.msra.mxu0 0
      %518 = vmatprep.subr.bf16.mxu0 0
      %519 = vmatpush1.bf16.msra.mxu0 0
      %520 = vmatprep.subr.bf16.mxu0 0
      %521 = vmatpush1.bf16.msra.mxu0 0
      %522 = vmatprep.subr.bf16.mxu0 0
      %523 = vmatpush1.bf16.msra.mxu0 0
      %524 = vmatprep.subr.bf16.mxu0 0
      %525 = vmatpush1.bf16.msra.mxu0 0
      %526 = vmatprep.subr.bf16.mxu0 0
      %527 = vmatpush1.bf16.msra.mxu0 0
      %528 = vmatprep.subr.bf16.mxu0 0
      %529 = vmatpush1.bf16.msra.mxu0 0
      %530 = vmatprep.subr.bf16.mxu0 0
      %531 = vmatpush1.bf16.msra.mxu0 0
      %532 = vmatprep.subr.bf16.mxu0 0
      %533 = vmatpush1.bf16.msra.mxu0 0
      %534 = vmatprep.subr.bf16.mxu0 0
      %535 = vmatpush1.bf16.msra.mxu0 0
      %536 = vmatprep.subr.bf16.mxu0 0
      %537 = vmatpush1.bf16.msra.mxu0 0
      %538 = vmatprep.subr.bf16.mxu0 0
      %539 = vmatpush1.bf16.msra.mxu0 0
      %540 = vmatprep.subr.bf16.mxu0 0
      %541 = vmatpush1.bf16.msra.mxu0 0
      %542 = vmatprep.subr.bf16.mxu0 0
      %543 = vmatpush1.bf16.msra.mxu0 0
      %544 = vmatprep.mubr.bf16.mxu0 0
      %545 = vmatmul.mubr.bf16.gmra.mrb[0].mxu0 %v507
      %v546 = vpop.f32.mrb[0].mxu0
      %v547 = vadd.f32 %v501, %v546
      %v548 = vpop.f32.mrb[0].mxu0
      %v549 = vpop.f32.mrb[0].mxu0
      %v550 = vpop.f32.mrb[0].mxu0
      %551 = vdwg.mxu0
      %s552 = scalar_lea.vmem %s3, 8
      %v553 = vld [vmem:[%s552] sm:$0xf]
      %554 = vrot.lane.b32.xlu0 %v450, 126
      %v555 = vpop.permute.xlu0 %554
      %556 = vrot.lane.b32.xlu0 %v451, 126
      %v557 = vpop.permute.xlu0 %556
      %vm558 = vcmask 1031168
      %v559 = vsel %vm558, %v555, %v557
      %v561 = vsel %vm458, %v553, 0
      %v564 = vsel %vm462, %v559, 0
      %566 = vmatprep.subr.bf16.mxu0 0
      %567 = vmatpush1.bf16.msra.mxu0 %v564
      %568 = vmatprep.subr.bf16.mxu0 0
      %569 = vmatpush1.bf16.msra.mxu0 0
      %570 = vmatprep.subr.bf16.mxu0 0
      %571 = vmatpush1.bf16.msra.mxu0 0
      %572 = vmatprep.subr.bf16.mxu0 0
      %573 = vmatpush1.bf16.msra.mxu0 0
      %574 = vmatprep.subr.bf16.mxu0 0
      %575 = vmatpush1.bf16.msra.mxu0 0
      %576 = vmatprep.subr.bf16.mxu0 0
      %577 = vmatpush1.bf16.msra.mxu0 0
      %578 = vmatprep.subr.bf16.mxu0 0
      %579 = vmatpush1.bf16.msra.mxu0 0
      %580 = vmatprep.subr.bf16.mxu0 0
      %581 = vmatpush1.bf16.msra.mxu0 0
      %582 = vmatprep.subr.bf16.mxu0 0
      %583 = vmatpush1.bf16.msra.mxu0 0
      %584 = vmatprep.subr.bf16.mxu0 0
      %585 = vmatpush1.bf16.msra.mxu0 0
      %586 = vmatprep.subr.bf16.mxu0 0
      %587 = vmatpush1.bf16.msra.mxu0 0
      %588 = vmatprep.subr.bf16.mxu0 0
      %589 = vmatpush1.bf16.msra.mxu0 0
      %590 = vmatprep.subr.bf16.mxu0 0
      %591 = vmatpush1.bf16.msra.mxu0 0
      %592 = vmatprep.subr.bf16.mxu0 0
      %593 = vmatpush1.bf16.msra.mxu0 0
      %594 = vmatprep.subr.bf16.mxu0 0
      %595 = vmatpush1.bf16.msra.mxu0 0
      %596 = vmatprep.subr.bf16.mxu0 0
      %597 = vmatpush1.bf16.msra.mxu0 0
      %598 = vmatprep.mubr.bf16.mxu0 0
      %599 = vmatmul.mubr.bf16.gmra.mrb[0].mxu0 %v561
      %v600 = vpop.f32.mrb[0].mxu0
      %v601 = vadd.f32 0.0, %v600
      %v602 = vpop.f32.mrb[0].mxu0
      %v603 = vpop.f32.mrb[0].mxu0
      %v604 = vpop.f32.mrb[0].mxu0
      %605 = vdwg.mxu0
      %v606 = vadd.f32 %v547, %v601
      %s607 = scalar_lea.vmem %s3, 12
      %v608 = vld [vmem:[%s607] sm:$0xf]
      %609 = vrot.lane.b32.xlu0 %v450, 118
      %v610 = vpop.permute.xlu0 %609
      %611 = vrot.lane.b32.xlu0 %v451, 118
      %v612 = vpop.permute.xlu0 %611
      %vm613 = vcmask 965632
      %v614 = vsel %vm613, %v610, %v612
      %v616 = vsel %vm458, %v608, 0
      %v619 = vsel %vm462, %v614, 0
      %621 = vmatprep.subr.bf16.mxu0 0
      %622 = vmatpush1.bf16.msra.mxu0 %v619
      %623 = vmatprep.subr.bf16.mxu0 0
      %624 = vmatpush1.bf16.msra.mxu0 0
      %625 = vmatprep.subr.bf16.mxu0 0
      %626 = vmatpush1.bf16.msra.mxu0 0
      %627 = vmatprep.subr.bf16.mxu0 0
      %628 = vmatpush1.bf16.msra.mxu0 0
      %629 = vmatprep.subr.bf16.mxu0 0
      %630 = vmatpush1.bf16.msra.mxu0 0
      %631 = vmatprep.subr.bf16.mxu0 0
      %632 = vmatpush1.bf16.msra.mxu0 0
      %633 = vmatprep.subr.bf16.mxu0 0
      %634 = vmatpush1.bf16.msra.mxu0 0
      %635 = vmatprep.subr.bf16.mxu0 0
      %636 = vmatpush1.bf16.msra.mxu0 0
      %637 = vmatprep.subr.bf16.mxu0 0
      %638 = vmatpush1.bf16.msra.mxu0 0
      %639 = vmatprep.subr.bf16.mxu0 0
      %640 = vmatpush1.bf16.msra.mxu0 0
      %641 = vmatprep.subr.bf16.mxu0 0
      %642 = vmatpush1.bf16.msra.mxu0 0
      %643 = vmatprep.subr.bf16.mxu0 0
      %644 = vmatpush1.bf16.msra.mxu0 0
      %645 = vmatprep.subr.bf16.mxu0 0
      %646 = vmatpush1.bf16.msra.mxu0 0
      %647 = vmatprep.subr.bf16.mxu0 0
      %648 = vmatpush1.bf16.msra.mxu0 0
      %649 = vmatprep.subr.bf16.mxu0 0
      %650 = vmatpush1.bf16.msra.mxu0 0
      %651 = vmatprep.subr.bf16.mxu0 0
      %652 = vmatpush1.bf16.msra.mxu0 0
      %653 = vmatprep.mubr.bf16.mxu0 0
      %654 = vmatmul.mubr.bf16.gmra.mrb[0].mxu0 %v616
      %v655 = vpop.f32.mrb[0].mxu0
      %v656 = vadd.f32 0.0, %v655
      %v657 = vpop.f32.mrb[0].mxu0
      %v658 = vpop.f32.mrb[0].mxu0
      %v659 = vpop.f32.mrb[0].mxu0
      %660 = vdwg.mxu0
      %v661 = vadd.f32 %v606, %v656
      %s662 = scalar_lea.vmem %s3, 16
      %v663 = vld [vmem:[%s662] sm:$0xf]
      %664 = vrot.lane.b32.xlu0 %v450, 117
      %v665 = vpop.permute.xlu0 %664
      %666 = vrot.lane.b32.xlu0 %v451, 117
      %v667 = vpop.permute.xlu0 %666
      %vm668 = vcmask 957440
      %v669 = vsel %vm668, %v665, %v667
      %v671 = vsel %vm458, %v663, 0
      %v674 = vsel %vm462, %v669, 0
      %676 = vmatprep.subr.bf16.mxu0 0
      %677 = vmatpush1.bf16.msra.mxu0 %v674
      %678 = vmatprep.subr.bf16.mxu0 0
      %679 = vmatpush1.bf16.msra.mxu0 0
      %680 = vmatprep.subr.bf16.mxu0 0
      %681 = vmatpush1.bf16.msra.mxu0 0
      %682 = vmatprep.subr.bf16.mxu0 0
      %683 = vmatpush1.bf16.msra.mxu0 0
      %684 = vmatprep.subr.bf16.mxu0 0
      %685 = vmatpush1.bf16.msra.mxu0 0
      %686 = vmatprep.subr.bf16.mxu0 0
      %687 = vmatpush1.bf16.msra.mxu0 0
      %688 = vmatprep.subr.bf16.mxu0 0
      %689 = vmatpush1.bf16.msra.mxu0 0
      %690 = vmatprep.subr.bf16.mxu0 0
      %691 = vmatpush1.bf16.msra.mxu0 0
      %692 = vmatprep.subr.bf16.mxu0 0
      %693 = vmatpush1.bf16.msra.mxu0 0
      %694 = vmatprep.subr.bf16.mxu0 0
      %695 = vmatpush1.bf16.msra.mxu0 0
      %696 = vmatprep.subr.bf16.mxu0 0
      %697 = vmatpush1.bf16.msra.mxu0 0
      %698 = vmatprep.subr.bf16.mxu0 0
      %699 = vmatpush1.bf16.msra.mxu0 0
      %700 = vmatprep.subr.bf16.mxu0 0
      %701 = vmatpush1.bf16.msra.mxu0 0
      %702 = vmatprep.subr.bf16.mxu0 0
      %703 = vmatpush1.bf16.msra.mxu0 0
      %704 = vmatprep.subr.bf16.mxu0 0
      %705 = vmatpush1.bf16.msra.mxu0 0
      %706 = vmatprep.subr.bf16.mxu0 0
      %707 = vmatpush1.bf16.msra.mxu0 0
      %708 = vmatprep.mubr.bf16.mxu0 0
      %709 = vmatmul.mubr.bf16.gmra.mrb[0].mxu0 %v671
      %v710 = vpop.f32.mrb[0].mxu0
      %v711 = vadd.f32 0.0, %v710
      %v712 = vpop.f32.mrb[0].mxu0
      %v713 = vpop.f32.mrb[0].mxu0
      %v714 = vpop.f32.mrb[0].mxu0
      %715 = vdwg.mxu0
      %v716 = vadd.f32 %v661, %v711
      %s717 = scalar_lea.vmem %s3, 20
      %v718 = vld [vmem:[%s717] sm:$0xf]
      %719 = vrot.lane.b32.xlu0 %v450, 116
      %v720 = vpop.permute.xlu0 %719
      %721 = vrot.lane.b32.xlu0 %v451, 116
      %v722 = vpop.permute.xlu0 %721
      %vm723 = vcmask 949248
      %v724 = vsel %vm723, %v720, %v722
      %v726 = vsel %vm458, %v718, 0
      %v729 = vsel %vm462, %v724, 0
      %731 = vmatprep.subr.bf16.mxu0 0
      %732 = vmatpush1.bf16.msra.mxu0 %v729
      %733 = vmatprep.subr.bf16.mxu0 0
      %734 = vmatpush1.bf16.msra.mxu0 0
      %735 = vmatprep.subr.bf16.mxu0 0
      %736 = vmatpush1.bf16.msra.mxu0 0
      %737 = vmatprep.subr.bf16.mxu0 0
      %738 = vmatpush1.bf16.msra.mxu0 0
      %739 = vmatprep.subr.bf16.mxu0 0
      %740 = vmatpush1.bf16.msra.mxu0 0
      %741 = vmatprep.subr.bf16.mxu0 0
      %742 = vmatpush1.bf16.msra.mxu0 0
      %743 = vmatprep.subr.bf16.mxu0 0
      %744 = vmatpush1.bf16.msra.mxu0 0
      %745 = vmatprep.subr.bf16.mxu0 0
      %746 = vmatpush1.bf16.msra.mxu0 0
      %747 = vmatprep.subr.bf16.mxu0 0
      %748 = vmatpush1.bf16.msra.mxu0 0
      %749 = vmatprep.subr.bf16.mxu0 0
      %750 = vmatpush1.bf16.msra.mxu0 0
      %751 = vmatprep.subr.bf16.mxu0 0
      %752 = vmatpush1.bf16.msra.mxu0 0
      %753 = vmatprep.subr.bf16.mxu0 0
      %754 = vmatpush1.bf16.msra.mxu0 0
      %755 = vmatprep.subr.bf16.mxu0 0
      %756 = vmatpush1.bf16.msra.mxu0 0
      %757 = vmatprep.subr.bf16.mxu0 0
      %758 = vmatpush1.bf16.msra.mxu0 0
      %759 = vmatprep.subr.bf16.mxu0 0
      %760 = vmatpush1.bf16.msra.mxu0 0
      %761 = vmatprep.subr.bf16.mxu0 0
      %762 = vmatpush1.bf16.msra.mxu0 0
      %763 = vmatprep.mubr.bf16.mxu0 0
      %764 = vmatmul.mubr.bf16.gmra.mrb[0].mxu0 %v726
      %v765 = vpop.f32.mrb[0].mxu0
      %v766 = vadd.f32 0.0, %v765
      %v767 = vpop.f32.mrb[0].mxu0
      %v768 = vpop.f32.mrb[0].mxu0
      %v769 = vpop.f32.mrb[0].mxu0
      %770 = vdwg.mxu0
      %v771 = vadd.f32 %v716, %v766
      %s772 = scalar_lea.vmem %s3, 24
      %v773 = vld [vmem:[%s772] sm:$0xf]
      %774 = vrot.lane.b32.xlu0 %v450, 108
      %v775 = vpop.permute.xlu0 %774
      %776 = vrot.lane.b32.xlu0 %v451, 108
      %v777 = vpop.permute.xlu0 %776
      %vm778 = vcmask 883712
      %v779 = vsel %vm778, %v775, %v777
      %v781 = vsel %vm458, %v773, 0
      %v784 = vsel %vm462, %v779, 0
      %786 = vmatprep.subr.bf16.mxu0 0
      %787 = vmatpush1.bf16.msra.mxu0 %v784
      %788 = vmatprep.subr.bf16.mxu0 0
      %789 = vmatpush1.bf16.msra.mxu0 0
      %790 = vmatprep.subr.bf16.mxu0 0
      %791 = vmatpush1.bf16.msra.mxu0 0
      %792 = vmatprep.subr.bf16.mxu0 0
      %793 = vmatpush1.bf16.msra.mxu0 0
      %794 = vmatprep.subr.bf16.mxu0 0
      %795 = vmatpush1.bf16.msra.mxu0 0
      %796 = vmatprep.subr.bf16.mxu0 0
      %797 = vmatpush1.bf16.msra.mxu0 0
      %798 = vmatprep.subr.bf16.mxu0 0
      %799 = vmatpush1.bf16.msra.mxu0 0
      %800 = vmatprep.subr.bf16.mxu0 0
      %801 = vmatpush1.bf16.msra.mxu0 0
      %802 = vmatprep.subr.bf16.mxu0 0
      %803 = vmatpush1.bf16.msra.mxu0 0
      %804 = vmatprep.subr.bf16.mxu0 0
      %805 = vmatpush1.bf16.msra.mxu0 0
      %806 = vmatprep.subr.bf16.mxu0 0
      %807 = vmatpush1.bf16.msra.mxu0 0
      %808 = vmatprep.subr.bf16.mxu0 0
      %809 = vmatpush1.bf16.msra.mxu0 0
      %810 = vmatprep.subr.bf16.mxu0 0
      %811 = vmatpush1.bf16.msra.mxu0 0
      %812 = vmatprep.subr.bf16.mxu0 0
      %813 = vmatpush1.bf16.msra.mxu0 0
      %814 = vmatprep.subr.bf16.mxu0 0
      %815 = vmatpush1.bf16.msra.mxu0 0
      %816 = vmatprep.subr.bf16.mxu0 0
      %817 = vmatpush1.bf16.msra.mxu0 0
      %818 = vmatprep.mubr.bf16.mxu0 0
      %819 = vmatmul.mubr.bf16.gmra.mrb[0].mxu0 %v781
      %v820 = vpop.f32.mrb[0].mxu0
      %v821 = vadd.f32 0.0, %v820
      %v822 = vpop.f32.mrb[0].mxu0
      %v823 = vpop.f32.mrb[0].mxu0
      %v824 = vpop.f32.mrb[0].mxu0
      %825 = vdwg.mxu0
      %v826 = vadd.f32 %v771, %v821
      %s827 = scalar_lea.vmem %s3, 28
      %v828 = vld [vmem:[%s827] sm:$0xf]
      %829 = vrot.lane.b32.xlu0 %v450, 107
      %v830 = vpop.permute.xlu0 %829
      %831 = vrot.lane.b32.xlu0 %v451, 107
      %v832 = vpop.permute.xlu0 %831
      %vm833 = vcmask 875520
      %v834 = vsel %vm833, %v830, %v832
      %v836 = vsel %vm458, %v828, 0
      %v839 = vsel %vm462, %v834, 0
      %841 = vmatprep.subr.bf16.mxu0 0
      %842 = vmatpush1.bf16.msra.mxu0 %v839
      %843 = vmatprep.subr.bf16.mxu0 0
      %844 = vmatpush1.bf16.msra.mxu0 0
      %845 = vmatprep.subr.bf16.mxu0 0
      %846 = vmatpush1.bf16.msra.mxu0 0
      %847 = vmatprep.subr.bf16.mxu0 0
      %848 = vmatpush1.bf16.msra.mxu0 0
      %849 = vmatprep.subr.bf16.mxu0 0
      %850 = vmatpush1.bf16.msra.mxu0 0
      %851 = vmatprep.subr.bf16.mxu0 0
      %852 = vmatpush1.bf16.msra.mxu0 0
      %853 = vmatprep.subr.bf16.mxu0 0
      %854 = vmatpush1.bf16.msra.mxu0 0
      %855 = vmatprep.subr.bf16.mxu0 0
      %856 = vmatpush1.bf16.msra.mxu0 0
      %857 = vmatprep.subr.bf16.mxu0 0
      %858 = vmatpush1.bf16.msra.mxu0 0
      %859 = vmatprep.subr.bf16.mxu0 0
      %860 = vmatpush1.bf16.msra.mxu0 0
      %861 = vmatprep.subr.bf16.mxu0 0
      %862 = vmatpush1.bf16.msra.mxu0 0
      %863 = vmatprep.subr.bf16.mxu0 0
      %864 = vmatpush1.bf16.msra.mxu0 0
      %865 = vmatprep.subr.bf16.mxu0 0
      %866 = vmatpush1.bf16.msra.mxu0 0
      %867 = vmatprep.subr.bf16.mxu0 0
      %868 = vmatpush1.bf16.msra.mxu0 0
      %869 = vmatprep.subr.bf16.mxu0 0
      %870 = vmatpush1.bf16.msra.mxu0 0
      %871 = vmatprep.subr.bf16.mxu0 0
      %872 = vmatpush1.bf16.msra.mxu0 0
      %873 = vmatprep.mubr.bf16.mxu0 0
      %874 = vmatmul.mubr.bf16.gmra.mrb[0].mxu0 %v836
      %v875 = vpop.f32.mrb[0].mxu0
      %v876 = vadd.f32 0.0, %v875
      %v877 = vpop.f32.mrb[0].mxu0
      %v878 = vpop.f32.mrb[0].mxu0
      %v879 = vpop.f32.mrb[0].mxu0
      %880 = vdwg.mxu0
      %v881 = vadd.f32 %v826, %v876
      %s882 = scalar_lea.vmem %s3, 32
      %v883 = vld [vmem:[%s882] sm:$0xf]
      %884 = vrot.lane.b32.xlu0 %v450, 106
      %v885 = vpop.permute.xlu0 %884
      %886 = vrot.lane.b32.xlu0 %v451, 106
      %v887 = vpop.permute.xlu0 %886
      %vm888 = vcmask 867328
      %v889 = vsel %vm888, %v885, %v887
      %v891 = vsel %vm458, %v883, 0
      %v894 = vsel %vm462, %v889, 0
      %896 = vmatprep.subr.bf16.mxu0 0
      %897 = vmatpush1.bf16.msra.mxu0 %v894
      %898 = vmatprep.subr.bf16.mxu0 0
      %899 = vmatpush1.bf16.msra.mxu0 0
      %900 = vmatprep.subr.bf16.mxu0 0
      %901 = vmatpush1.bf16.msra.mxu0 0
      %902 = vmatprep.subr.bf16.mxu0 0
      %903 = vmatpush1.bf16.msra.mxu0 0
      %904 = vmatprep.subr.bf16.mxu0 0
      %905 = vmatpush1.bf16.msra.mxu0 0
      %906 = vmatprep.subr.bf16.mxu0 0
      %907 = vmatpush1.bf16.msra.mxu0 0
      %908 = vmatprep.subr.bf16.mxu0 0
      %909 = vmatpush1.bf16.msra.mxu0 0
      %910 = vmatprep.subr.bf16.mxu0 0
      %911 = vmatpush1.bf16.msra.mxu0 0
      %912 = vmatprep.subr.bf16.mxu0 0
      %913 = vmatpush1.bf16.msra.mxu0 0
      %914 = vmatprep.subr.bf16.mxu0 0
      %915 = vmatpush1.bf16.msra.mxu0 0
      %916 = vmatprep.subr.bf16.mxu0 0
      %917 = vmatpush1.bf16.msra.mxu0 0
      %918 = vmatprep.subr.bf16.mxu0 0
      %919 = vmatpush1.bf16.msra.mxu0 0
      %920 = vmatprep.subr.bf16.mxu0 0
      %921 = vmatpush1.bf16.msra.mxu0 0
      %922 = vmatprep.subr.bf16.mxu0 0
      %923 = vmatpush1.bf16.msra.mxu0 0
      %924 = vmatprep.subr.bf16.mxu0 0
      %925 = vmatpush1.bf16.msra.mxu0 0
      %926 = vmatprep.subr.bf16.mxu0 0
      %927 = vmatpush1.bf16.msra.mxu0 0
      %928 = vmatprep.mubr.bf16.mxu0 0
      %929 = vmatmul.mubr.bf16.gmra.mrb[0].mxu0 %v891
      %v930 = vpop.f32.mrb[0].mxu0
      %v931 = vadd.f32 0.0, %v930
      %v932 = vpop.f32.mrb[0].mxu0
      %v933 = vpop.f32.mrb[0].mxu0
      %v934 = vpop.f32.mrb[0].mxu0
      %935 = vdwg.mxu0
      %v936 = vadd.f32 %v881, %v931
      %s937 = scalar_lea.vmem %s3, 36
      %v938 = vld [vmem:[%s937] sm:$0xf]
      %v940 = vsel %vm458, %v938, 0
      %v943 = vsel %vm462, %v438, 0
      %945 = vmatprep.subr.bf16.mxu0 0
      %946 = vmatpush1.bf16.msra.mxu0 %v943
      %947 = vmatprep.subr.bf16.mxu0 0
      %948 = vmatpush1.bf16.msra.mxu0 0
      %949 = vmatprep.subr.bf16.mxu0 0
      %950 = vmatpush1.bf16.msra.mxu0 0
      %951 = vmatprep.subr.bf16.mxu0 0
      %952 = vmatpush1.bf16.msra.mxu0 0
      %953 = vmatprep.subr.bf16.mxu0 0
      %954 = vmatpush1.bf16.msra.mxu0 0
      %955 = vmatprep.subr.bf16.mxu0 0
      %956 = vmatpush1.bf16.msra.mxu0 0
      %957 = vmatprep.subr.bf16.mxu0 0
      %958 = vmatpush1.bf16.msra.mxu0 0
      %959 = vmatprep.subr.bf16.mxu0 0
      %960 = vmatpush1.bf16.msra.mxu0 0
      %961 = vmatprep.subr.bf16.mxu0 0
      %962 = vmatpush1.bf16.msra.mxu0 0
      %963 = vmatprep.subr.bf16.mxu0 0
      %964 = vmatpush1.bf16.msra.mxu0 0
      %965 = vmatprep.subr.bf16.mxu0 0
      %966 = vmatpush1.bf16.msra.mxu0 0
      %967 = vmatprep.subr.bf16.mxu0 0
      %968 = vmatpush1.bf16.msra.mxu0 0
      %969 = vmatprep.subr.bf16.mxu0 0
      %970 = vmatpush1.bf16.msra.mxu0 0
      %971 = vmatprep.subr.bf16.mxu0 0
      %972 = vmatpush1.bf16.msra.mxu0 0
      %973 = vmatprep.subr.bf16.mxu0 0
      %974 = vmatpush1.bf16.msra.mxu0 0
      %975 = vmatprep.subr.bf16.mxu0 0
      %976 = vmatpush1.bf16.msra.mxu0 0
      %977 = vmatprep.mubr.bf16.mxu0 0
      %978 = vmatmul.mubr.bf16.gmra.mrb[0].mxu0 %v940
      %v979 = vpop.f32.mrb[0].mxu0
      %v980 = vadd.f32 0.0, %v979
      %v981 = vpop.f32.mrb[0].mxu0
      %v982 = vpop.f32.mrb[0].mxu0
      %v983 = vpop.f32.mrb[0].mxu0
      %984 = vdwg.mxu0
      %v985 = vadd.f32 %v936, %v980
      %s986 = scalar_lea.vmem %s3, 40
      %v987 = vld [vmem:[%s986] sm:$0xf]
      %v990 = vunpack.c.l.s4 1983009808
      %v991 = vunpack.c.0.s8 %v990
      %v992 = vlaneseq
      %v993 = vshrl.u32 %v992, 7
      %v994 = vsub.s32 %v991, %v993
      %v995 = vrot.slane %v438, %v994
      %v996 = vcombine.high %v995, %v995
      %997 = vrot.lane.b32.xlu0 %v995, 127
      %v998 = vpop.permute.xlu0 %997
      %999 = vrot.lane.b32.xlu0 %v996, 127
      %v1000 = vpop.permute.xlu0 %999
      %v1001 = vsel %vm456, %v998, %v1000
      %v1003 = vsel %vm458, %v987, 0
      %v1006 = vsel %vm462, %v1001, 0
      %1008 = vmatprep.subr.bf16.mxu0 0
      %1009 = vmatpush1.bf16.msra.mxu0 %v1006
      %1010 = vmatprep.subr.bf16.mxu0 0
      %1011 = vmatpush1.bf16.msra.mxu0 0
      %1012 = vmatprep.subr.bf16.mxu0 0
      %1013 = vmatpush1.bf16.msra.mxu0 0
      %1014 = vmatprep.subr.bf16.mxu0 0
      %1015 = vmatpush1.bf16.msra.mxu0 0
      %1016 = vmatprep.subr.bf16.mxu0 0
      %1017 = vmatpush1.bf16.msra.mxu0 0
      %1018 = vmatprep.subr.bf16.mxu0 0
      %1019 = vmatpush1.bf16.msra.mxu0 0
      %1020 = vmatprep.subr.bf16.mxu0 0
      %1021 = vmatpush1.bf16.msra.mxu0 0
      %1022 = vmatprep.subr.bf16.mxu0 0
      %1023 = vmatpush1.bf16.msra.mxu0 0
      %1024 = vmatprep.subr.bf16.mxu0 0
      %1025 = vmatpush1.bf16.msra.mxu0 0
      %1026 = vmatprep.subr.bf16.mxu0 0
      %1027 = vmatpush1.bf16.msra.mxu0 0
      %1028 = vmatprep.subr.bf16.mxu0 0
      %1029 = vmatpush1.bf16.msra.mxu0 0
      %1030 = vmatprep.subr.bf16.mxu0 0
      %1031 = vmatpush1.bf16.msra.mxu0 0
      %1032 = vmatprep.subr.bf16.mxu0 0
      %1033 = vmatpush1.bf16.msra.mxu0 0
      %1034 = vmatprep.subr.bf16.mxu0 0
      %1035 = vmatpush1.bf16.msra.mxu0 0
      %1036 = vmatprep.subr.bf16.mxu0 0
      %1037 = vmatpush1.bf16.msra.mxu0 0
      %1038 = vmatprep.subr.bf16.mxu0 0
      %1039 = vmatpush1.bf16.msra.mxu0 0
      %1040 = vmatprep.mubr.bf16.mxu0 0
      %1041 = vmatmul.mubr.bf16.gmra.mrb[0].mxu0 %v1003
      %v1042 = vpop.f32.mrb[0].mxu0
      %v1043 = vadd.f32 0.0, %v1042
      %v1044 = vpop.f32.mrb[0].mxu0
      %v1045 = vpop.f32.mrb[0].mxu0
      %v1046 = vpop.f32.mrb[0].mxu0
      %1047 = vdwg.mxu0
      %v1048 = vadd.f32 %v985, %v1043
      %s1049 = scalar_lea.vmem %s3, 44
      %v1050 = vld [vmem:[%s1049] sm:$0xf]
      %1051 = vrot.lane.b32.xlu0 %v995, 126
      %v1052 = vpop.permute.xlu0 %1051
      %1053 = vrot.lane.b32.xlu0 %v996, 126
      %v1054 = vpop.permute.xlu0 %1053
      %v1055 = vsel %vm558, %v1052, %v1054
      %v1057 = vsel %vm458, %v1050, 0
      %v1060 = vsel %vm462, %v1055, 0
      %1062 = vmatprep.subr.bf16.mxu0 0
      %1063 = vmatpush1.bf16.msra.mxu0 %v1060
      %1064 = vmatprep.subr.bf16.mxu0 0
      %1065 = vmatpush1.bf16.msra.mxu0 0
      %1066 = vmatprep.subr.bf16.mxu0 0
      %1067 = vmatpush1.bf16.msra.mxu0 0
      %1068 = vmatprep.subr.bf16.mxu0 0
      %1069 = vmatpush1.bf16.msra.mxu0 0
      %1070 = vmatprep.subr.bf16.mxu0 0
      %1071 = vmatpush1.bf16.msra.mxu0 0
      %1072 = vmatprep.subr.bf16.mxu0 0
      %1073 = vmatpush1.bf16.msra.mxu0 0
      %1074 = vmatprep.subr.bf16.mxu0 0
      %1075 = vmatpush1.bf16.msra.mxu0 0
      %1076 = vmatprep.subr.bf16.mxu0 0
      %1077 = vmatpush1.bf16.msra.mxu0 0
      %1078 = vmatprep.subr.bf16.mxu0 0
      %1079 = vmatpush1.bf16.msra.mxu0 0
      %1080 = vmatprep.subr.bf16.mxu0 0
      %1081 = vmatpush1.bf16.msra.mxu0 0
      %1082 = vmatprep.subr.bf16.mxu0 0
      %1083 = vmatpush1.bf16.msra.mxu0 0
      %1084 = vmatprep.subr.bf16.mxu0 0
      %1085 = vmatpush1.bf16.msra.mxu0 0
      %1086 = vmatprep.subr.bf16.mxu0 0
      %1087 = vmatpush1.bf16.msra.mxu0 0
      %1088 = vmatprep.subr.bf16.mxu0 0
      %1089 = vmatpush1.bf16.msra.mxu0 0
      %1090 = vmatprep.subr.bf16.mxu0 0
      %1091 = vmatpush1.bf16.msra.mxu0 0
      %1092 = vmatprep.subr.bf16.mxu0 0
      %1093 = vmatpush1.bf16.msra.mxu0 0
      %1094 = vmatprep.mubr.bf16.mxu0 0
      %1095 = vmatmul.mubr.bf16.gmra.mrb[0].mxu0 %v1057
      %v1096 = vpop.f32.mrb[0].mxu0
      %v1097 = vadd.f32 0.0, %v1096
      %v1098 = vpop.f32.mrb[0].mxu0
      %v1099 = vpop.f32.mrb[0].mxu0
      %v1100 = vpop.f32.mrb[0].mxu0
      %1101 = vdwg.mxu0
      %v1102 = vadd.f32 %v1048, %v1097
      %s1103 = scalar_lea.vmem %s3, 48
      %v1104 = vld [vmem:[%s1103] sm:$0xf]
      %1105 = vrot.lane.b32.xlu0 %v995, 118
      %v1106 = vpop.permute.xlu0 %1105
      %1107 = vrot.lane.b32.xlu0 %v996, 118
      %v1108 = vpop.permute.xlu0 %1107
      %v1109 = vsel %vm613, %v1106, %v1108
      %v1111 = vsel %vm458, %v1104, 0
      %v1114 = vsel %vm462, %v1109, 0
      %1116 = vmatprep.subr.bf16.mxu0 0
      %1117 = vmatpush1.bf16.msra.mxu0 %v1114
      %1118 = vmatprep.subr.bf16.mxu0 0
      %1119 = vmatpush1.bf16.msra.mxu0 0
      %1120 = vmatprep.subr.bf16.mxu0 0
      %1121 = vmatpush1.bf16.msra.mxu0 0
      %1122 = vmatprep.subr.bf16.mxu0 0
      %1123 = vmatpush1.bf16.msra.mxu0 0
      %1124 = vmatprep.subr.bf16.mxu0 0
      %1125 = vmatpush1.bf16.msra.mxu0 0
      %1126 = vmatprep.subr.bf16.mxu0 0
      %1127 = vmatpush1.bf16.msra.mxu0 0
      %1128 = vmatprep.subr.bf16.mxu0 0
      %1129 = vmatpush1.bf16.msra.mxu0 0
      %1130 = vmatprep.subr.bf16.mxu0 0
      %1131 = vmatpush1.bf16.msra.mxu0 0
      %1132 = vmatprep.subr.bf16.mxu0 0
      %1133 = vmatpush1.bf16.msra.mxu0 0
      %1134 = vmatprep.subr.bf16.mxu0 0
      %1135 = vmatpush1.bf16.msra.mxu0 0
      %1136 = vmatprep.subr.bf16.mxu0 0
      %1137 = vmatpush1.bf16.msra.mxu0 0
      %1138 = vmatprep.subr.bf16.mxu0 0
      %1139 = vmatpush1.bf16.msra.mxu0 0
      %1140 = vmatprep.subr.bf16.mxu0 0
      %1141 = vmatpush1.bf16.msra.mxu0 0
      %1142 = vmatprep.subr.bf16.mxu0 0
      %1143 = vmatpush1.bf16.msra.mxu0 0
      %1144 = vmatprep.subr.bf16.mxu0 0
      %1145 = vmatpush1.bf16.msra.mxu0 0
      %1146 = vmatprep.subr.bf16.mxu0 0
      %1147 = vmatpush1.bf16.msra.mxu0 0
      %1148 = vmatprep.mubr.bf16.mxu0 0
      %1149 = vmatmul.mubr.bf16.gmra.mrb[0].mxu0 %v1111
      %v1150 = vpop.f32.mrb[0].mxu0
      %v1151 = vadd.f32 0.0, %v1150
      %v1152 = vpop.f32.mrb[0].mxu0
      %v1153 = vpop.f32.mrb[0].mxu0
      %v1154 = vpop.f32.mrb[0].mxu0
      %1155 = vdwg.mxu0
      %v1156 = vadd.f32 %v1102, %v1151
      %s1157 = scalar_lea.vmem %s3, 52
      %v1158 = vld [vmem:[%s1157] sm:$0xf]
      %1159 = vrot.lane.b32.xlu0 %v995, 117
      %v1160 = vpop.permute.xlu0 %1159
      %1161 = vrot.lane.b32.xlu0 %v996, 117
      %v1162 = vpop.permute.xlu0 %1161
      %v1163 = vsel %vm668, %v1160, %v1162
      %v1165 = vsel %vm458, %v1158, 0
      %v1168 = vsel %vm462, %v1163, 0
      %1170 = vmatprep.subr.bf16.mxu0 0
      %1171 = vmatpush1.bf16.msra.mxu0 %v1168
      %1172 = vmatprep.subr.bf16.mxu0 0
      %1173 = vmatpush1.bf16.msra.mxu0 0
      %1174 = vmatprep.subr.bf16.mxu0 0
      %1175 = vmatpush1.bf16.msra.mxu0 0
      %1176 = vmatprep.subr.bf16.mxu0 0
      %1177 = vmatpush1.bf16.msra.mxu0 0
      %1178 = vmatprep.subr.bf16.mxu0 0
      %1179 = vmatpush1.bf16.msra.mxu0 0
      %1180 = vmatprep.subr.bf16.mxu0 0
      %1181 = vmatpush1.bf16.msra.mxu0 0
      %1182 = vmatprep.subr.bf16.mxu0 0
      %1183 = vmatpush1.bf16.msra.mxu0 0
      %1184 = vmatprep.subr.bf16.mxu0 0
      %1185 = vmatpush1.bf16.msra.mxu0 0
      %1186 = vmatprep.subr.bf16.mxu0 0
      %1187 = vmatpush1.bf16.msra.mxu0 0
      %1188 = vmatprep.subr.bf16.mxu0 0
      %1189 = vmatpush1.bf16.msra.mxu0 0
      %1190 = vmatprep.subr.bf16.mxu0 0
      %1191 = vmatpush1.bf16.msra.mxu0 0
      %1192 = vmatprep.subr.bf16.mxu0 0
      %1193 = vmatpush1.bf16.msra.mxu0 0
      %1194 = vmatprep.subr.bf16.mxu0 0
      %1195 = vmatpush1.bf16.msra.mxu0 0
      %1196 = vmatprep.subr.bf16.mxu0 0
      %1197 = vmatpush1.bf16.msra.mxu0 0
      %1198 = vmatprep.subr.bf16.mxu0 0
      %1199 = vmatpush1.bf16.msra.mxu0 0
      %1200 = vmatprep.subr.bf16.mxu0 0
      %1201 = vmatpush1.bf16.msra.mxu0 0
      %1202 = vmatprep.mubr.bf16.mxu0 0
      %1203 = vmatmul.mubr.bf16.gmra.mrb[0].mxu0 %v1165
      %v1204 = vpop.f32.mrb[0].mxu0
      %v1205 = vadd.f32 0.0, %v1204
      %v1206 = vpop.f32.mrb[0].mxu0
      %v1207 = vpop.f32.mrb[0].mxu0
      %v1208 = vpop.f32.mrb[0].mxu0
      %1209 = vdwg.mxu0
      %v1210 = vadd.f32 %v1156, %v1205
      %s1211 = scalar_lea.vmem %s3, 56
      %v1212 = vld [vmem:[%s1211] sm:$0xf]
      %1213 = vrot.lane.b32.xlu0 %v995, 116
      %v1214 = vpop.permute.xlu0 %1213
      %1215 = vrot.lane.b32.xlu0 %v996, 116
      %v1216 = vpop.permute.xlu0 %1215
      %v1217 = vsel %vm723, %v1214, %v1216
      %v1219 = vsel %vm458, %v1212, 0
      %v1222 = vsel %vm462, %v1217, 0
      %1224 = vmatprep.subr.bf16.mxu0 0
      %1225 = vmatpush1.bf16.msra.mxu0 %v1222
      %1226 = vmatprep.subr.bf16.mxu0 0
      %1227 = vmatpush1.bf16.msra.mxu0 0
      %1228 = vmatprep.subr.bf16.mxu0 0
      %1229 = vmatpush1.bf16.msra.mxu0 0
      %1230 = vmatprep.subr.bf16.mxu0 0
      %1231 = vmatpush1.bf16.msra.mxu0 0
      %1232 = vmatprep.subr.bf16.mxu0 0
      %1233 = vmatpush1.bf16.msra.mxu0 0
      %1234 = vmatprep.subr.bf16.mxu0 0
      %1235 = vmatpush1.bf16.msra.mxu0 0
      %1236 = vmatprep.subr.bf16.mxu0 0
      %1237 = vmatpush1.bf16.msra.mxu0 0
      %1238 = vmatprep.subr.bf16.mxu0 0
      %1239 = vmatpush1.bf16.msra.mxu0 0
      %1240 = vmatprep.subr.bf16.mxu0 0
      %1241 = vmatpush1.bf16.msra.mxu0 0
      %1242 = vmatprep.subr.bf16.mxu0 0
      %1243 = vmatpush1.bf16.msra.mxu0 0
      %1244 = vmatprep.subr.bf16.mxu0 0
      %1245 = vmatpush1.bf16.msra.mxu0 0
      %1246 = vmatprep.subr.bf16.mxu0 0
      %1247 = vmatpush1.bf16.msra.mxu0 0
      %1248 = vmatprep.subr.bf16.mxu0 0
      %1249 = vmatpush1.bf16.msra.mxu0 0
      %1250 = vmatprep.subr.bf16.mxu0 0
      %1251 = vmatpush1.bf16.msra.mxu0 0
      %1252 = vmatprep.subr.bf16.mxu0 0
      %1253 = vmatpush1.bf16.msra.mxu0 0
      %1254 = vmatprep.subr.bf16.mxu0 0
      %1255 = vmatpush1.bf16.msra.mxu0 0
      %1256 = vmatprep.mubr.bf16.mxu0 0
      %1257 = vmatmul.mubr.bf16.gmra.mrb[0].mxu0 %v1219
      %v1258 = vpop.f32.mrb[0].mxu0
      %v1259 = vadd.f32 0.0, %v1258
      %v1260 = vpop.f32.mrb[0].mxu0
      %v1261 = vpop.f32.mrb[0].mxu0
      %v1262 = vpop.f32.mrb[0].mxu0
      %1263 = vdwg.mxu0
      %v1264 = vadd.f32 %v1210, %v1259
      %s1265 = scalar_lea.vmem %s3, 60
      %v1266 = vld [vmem:[%s1265] sm:$0xf]
      %1267 = vrot.lane.b32.xlu0 %v995, 108
      %v1268 = vpop.permute.xlu0 %1267
      %1269 = vrot.lane.b32.xlu0 %v996, 108
      %v1270 = vpop.permute.xlu0 %1269
      %v1271 = vsel %vm778, %v1268, %v1270
      %v1273 = vsel %vm458, %v1266, 0
      %v1276 = vsel %vm462, %v1271, 0
      %1278 = vmatprep.subr.bf16.mxu0 0
      %1279 = vmatpush1.bf16.msra.mxu0 %v1276
      %1280 = vmatprep.subr.bf16.mxu0 0
      %1281 = vmatpush1.bf16.msra.mxu0 0
      %1282 = vmatprep.subr.bf16.mxu0 0
      %1283 = vmatpush1.bf16.msra.mxu0 0
      %1284 = vmatprep.subr.bf16.mxu0 0
      %1285 = vmatpush1.bf16.msra.mxu0 0
      %1286 = vmatprep.subr.bf16.mxu0 0
      %1287 = vmatpush1.bf16.msra.mxu0 0
      %1288 = vmatprep.subr.bf16.mxu0 0
      %1289 = vmatpush1.bf16.msra.mxu0 0
      %1290 = vmatprep.subr.bf16.mxu0 0
      %1291 = vmatpush1.bf16.msra.mxu0 0
      %1292 = vmatprep.subr.bf16.mxu0 0
      %1293 = vmatpush1.bf16.msra.mxu0 0
      %1294 = vmatprep.subr.bf16.mxu0 0
      %1295 = vmatpush1.bf16.msra.mxu0 0
      %1296 = vmatprep.subr.bf16.mxu0 0
      %1297 = vmatpush1.bf16.msra.mxu0 0
      %1298 = vmatprep.subr.bf16.mxu0 0
      %1299 = vmatpush1.bf16.msra.mxu0 0
      %1300 = vmatprep.subr.bf16.mxu0 0
      %1301 = vmatpush1.bf16.msra.mxu0 0
      %1302 = vmatprep.subr.bf16.mxu0 0
      %1303 = vmatpush1.bf16.msra.mxu0 0
      %1304 = vmatprep.subr.bf16.mxu0 0
      %1305 = vmatpush1.bf16.msra.mxu0 0
      %1306 = vmatprep.subr.bf16.mxu0 0
      %1307 = vmatpush1.bf16.msra.mxu0 0
      %1308 = vmatprep.subr.bf16.mxu0 0
      %1309 = vmatpush1.bf16.msra.mxu0 0
      %1310 = vmatprep.mubr.bf16.mxu0 0
      %1311 = vmatmul.mubr.bf16.gmra.mrb[0].mxu0 %v1273
      %v1312 = vpop.f32.mrb[0].mxu0
      %v1313 = vadd.f32 0.0, %v1312
      %v1314 = vpop.f32.mrb[0].mxu0
      %v1315 = vpop.f32.mrb[0].mxu0
      %v1316 = vpop.f32.mrb[0].mxu0
      %1317 = vdwg.mxu0
      %v1318 = vadd.f32 %v1264, %v1313
      %s1319 = scalar_lea.vmem %s3, 64
      %v1320 = vld [vmem:[%s1319] sm:$0xf]
      %1321 = vrot.lane.b32.xlu0 %v995, 107
      %v1322 = vpop.permute.xlu0 %1321
      %1323 = vrot.lane.b32.xlu0 %v996, 107
      %v1324 = vpop.permute.xlu0 %1323
      %v1325 = vsel %vm833, %v1322, %v1324
      %v1327 = vsel %vm458, %v1320, 0
      %v1330 = vsel %vm462, %v1325, 0
      %1332 = vmatprep.subr.bf16.mxu0 0
      %1333 = vmatpush1.bf16.msra.mxu0 %v1330
      %1334 = vmatprep.subr.bf16.mxu0 0
      %1335 = vmatpush1.bf16.msra.mxu0 0
      %1336 = vmatprep.subr.bf16.mxu0 0
      %1337 = vmatpush1.bf16.msra.mxu0 0
      %1338 = vmatprep.subr.bf16.mxu0 0
      %1339 = vmatpush1.bf16.msra.mxu0 0
      %1340 = vmatprep.subr.bf16.mxu0 0
      %1341 = vmatpush1.bf16.msra.mxu0 0
      %1342 = vmatprep.subr.bf16.mxu0 0
      %1343 = vmatpush1.bf16.msra.mxu0 0
      %1344 = vmatprep.subr.bf16.mxu0 0
      %1345 = vmatpush1.bf16.msra.mxu0 0
      %1346 = vmatprep.subr.bf16.mxu0 0
      %1347 = vmatpush1.bf16.msra.mxu0 0
      %1348 = vmatprep.subr.bf16.mxu0 0
      %1349 = vmatpush1.bf16.msra.mxu0 0
      %1350 = vmatprep.subr.bf16.mxu0 0
      %1351 = vmatpush1.bf16.msra.mxu0 0
      %1352 = vmatprep.subr.bf16.mxu0 0
      %1353 = vmatpush1.bf16.msra.mxu0 0
      %1354 = vmatprep.subr.bf16.mxu0 0
      %1355 = vmatpush1.bf16.msra.mxu0 0
      %1356 = vmatprep.subr.bf16.mxu0 0
      %1357 = vmatpush1.bf16.msra.mxu0 0
      %1358 = vmatprep.subr.bf16.mxu0 0
      %1359 = vmatpush1.bf16.msra.mxu0 0
      %1360 = vmatprep.subr.bf16.mxu0 0
      %1361 = vmatpush1.bf16.msra.mxu0 0
      %1362 = vmatprep.subr.bf16.mxu0 0
      %1363 = vmatpush1.bf16.msra.mxu0 0
      %1364 = vmatprep.mubr.bf16.mxu0 0
      %1365 = vmatmul.mubr.bf16.gmra.mrb[0].mxu0 %v1327
      %v1366 = vpop.f32.mrb[0].mxu0
      %v1367 = vadd.f32 0.0, %v1366
      %v1368 = vpop.f32.mrb[0].mxu0
      %v1369 = vpop.f32.mrb[0].mxu0
      %v1370 = vpop.f32.mrb[0].mxu0
      %1371 = vdwg.mxu0
      %v1372 = vadd.f32 %v1318, %v1367
      %s1373 = scalar_lea.vmem %s3, 68
      %v1374 = vld [vmem:[%s1373] sm:$0xf]
      %1375 = vrot.lane.b32.xlu0 %v995, 106
      %v1376 = vpop.permute.xlu0 %1375
      %1377 = vrot.lane.b32.xlu0 %v996, 106
      %v1378 = vpop.permute.xlu0 %1377
      %v1379 = vsel %vm888, %v1376, %v1378
      %v1381 = vsel %vm458, %v1374, 0
      %v1384 = vsel %vm462, %v1379, 0
      %1386 = vmatprep.subr.bf16.mxu0 0
      %1387 = vmatpush1.bf16.msra.mxu0 %v1384
      %1388 = vmatprep.subr.bf16.mxu0 0
      %1389 = vmatpush1.bf16.msra.mxu0 0
      %1390 = vmatprep.subr.bf16.mxu0 0
      %1391 = vmatpush1.bf16.msra.mxu0 0
      %1392 = vmatprep.subr.bf16.mxu0 0
      %1393 = vmatpush1.bf16.msra.mxu0 0
      %1394 = vmatprep.subr.bf16.mxu0 0
      %1395 = vmatpush1.bf16.msra.mxu0 0
      %1396 = vmatprep.subr.bf16.mxu0 0
      %1397 = vmatpush1.bf16.msra.mxu0 0
      %1398 = vmatprep.subr.bf16.mxu0 0
      %1399 = vmatpush1.bf16.msra.mxu0 0
      %1400 = vmatprep.subr.bf16.mxu0 0
      %1401 = vmatpush1.bf16.msra.mxu0 0
      %1402 = vmatprep.subr.bf16.mxu0 0
      %1403 = vmatpush1.bf16.msra.mxu0 0
      %1404 = vmatprep.subr.bf16.mxu0 0
      %1405 = vmatpush1.bf16.msra.mxu0 0
      %1406 = vmatprep.subr.bf16.mxu0 0
      %1407 = vmatpush1.bf16.msra.mxu0 0
      %1408 = vmatprep.subr.bf16.mxu0 0
      %1409 = vmatpush1.bf16.msra.mxu0 0
      %1410 = vmatprep.subr.bf16.mxu0 0
      %1411 = vmatpush1.bf16.msra.mxu0 0
      %1412 = vmatprep.subr.bf16.mxu0 0
      %1413 = vmatpush1.bf16.msra.mxu0 0
      %1414 = vmatprep.subr.bf16.mxu0 0
      %1415 = vmatpush1.bf16.msra.mxu0 0
      %1416 = vmatprep.subr.bf16.mxu0 0
      %1417 = vmatpush1.bf16.msra.mxu0 0
      %1418 = vmatprep.mubr.bf16.mxu0 0
      %1419 = vmatmul.mubr.bf16.gmra.mrb[0].mxu0 %v1381
      %v1420 = vpop.f32.mrb[0].mxu0
      %v1421 = vadd.f32 0.0, %v1420
      %v1422 = vpop.f32.mrb[0].mxu0
      %v1423 = vpop.f32.mrb[0].mxu0
      %v1424 = vpop.f32.mrb[0].mxu0
      %1425 = vdwg.mxu0
      %v1426 = vadd.f32 %v1372, %v1421
      %s1427 = scalar_lea.vmem %s3, 72
      %v1428 = vld [vmem:[%s1427] sm:$0xf]
      %v1430 = vsel %vm458, %v1428, 0
      %v1433 = vsel %vm462, %v439, 0
      %1435 = vmatprep.subr.bf16.mxu0 0
      %1436 = vmatpush1.bf16.msra.mxu0 %v1433
      %1437 = vmatprep.subr.bf16.mxu0 0
      %1438 = vmatpush1.bf16.msra.mxu0 0
      %1439 = vmatprep.subr.bf16.mxu0 0
      %1440 = vmatpush1.bf16.msra.mxu0 0
      %1441 = vmatprep.subr.bf16.mxu0 0
      %1442 = vmatpush1.bf16.msra.mxu0 0
      %1443 = vmatprep.subr.bf16.mxu0 0
      %1444 = vmatpush1.bf16.msra.mxu0 0
      %1445 = vmatprep.subr.bf16.mxu0 0
      %1446 = vmatpush1.bf16.msra.mxu0 0
      %1447 = vmatprep.subr.bf16.mxu0 0
      %1448 = vmatpush1.bf16.msra.mxu0 0
      %1449 = vmatprep.subr.bf16.mxu0 0
      %1450 = vmatpush1.bf16.msra.mxu0 0
      %1451 = vmatprep.subr.bf16.mxu0 0
      %1452 = vmatpush1.bf16.msra.mxu0 0
      %1453 = vmatprep.subr.bf16.mxu0 0
      %1454 = vmatpush1.bf16.msra.mxu0 0
      %1455 = vmatprep.subr.bf16.mxu0 0
      %1456 = vmatpush1.bf16.msra.mxu0 0
      %1457 = vmatprep.subr.bf16.mxu0 0
      %1458 = vmatpush1.bf16.msra.mxu0 0
      %1459 = vmatprep.subr.bf16.mxu0 0
      %1460 = vmatpush1.bf16.msra.mxu0 0
      %1461 = vmatprep.subr.bf16.mxu0 0
      %1462 = vmatpush1.bf16.msra.mxu0 0
      %1463 = vmatprep.subr.bf16.mxu0 0
      %1464 = vmatpush1.bf16.msra.mxu0 0
      %1465 = vmatprep.subr.bf16.mxu0 0
      %1466 = vmatpush1.bf16.msra.mxu0 0
      %1467 = vmatprep.mubr.bf16.mxu0 0
      %1468 = vmatmul.mubr.bf16.gmra.mrb[0].mxu0 %v1430
      %v1469 = vpop.f32.mrb[0].mxu0
      %v1470 = vadd.f32 0.0, %v1469
      %v1471 = vpop.f32.mrb[0].mxu0
      %v1472 = vpop.f32.mrb[0].mxu0
      %v1473 = vpop.f32.mrb[0].mxu0
      %1474 = vdwg.mxu0
      %v1475 = vadd.f32 %v1426, %v1470
      %s1476 = scalar_lea.vmem %s3, 76
      %v1477 = vld [vmem:[%s1476] sm:$0xf]
      %v1480 = vunpack.c.l.s4 1983009808
      %v1481 = vunpack.c.0.s8 %v1480
      %v1482 = vlaneseq
      %v1483 = vshrl.u32 %v1482, 7
      %v1484 = vsub.s32 %v1481, %v1483
      %v1485 = vrot.slane %v439, %v1484
      %v1486 = vcombine.high %v1485, %v1485
      %1487 = vrot.lane.b32.xlu0 %v1485, 127
      %v1488 = vpop.permute.xlu0 %1487
      %1489 = vrot.lane.b32.xlu0 %v1486, 127
      %v1490 = vpop.permute.xlu0 %1489
      %v1491 = vsel %vm456, %v1488, %v1490
      %v1493 = vsel %vm458, %v1477, 0
      %v1496 = vsel %vm462, %v1491, 0
      %1498 = vmatprep.subr.bf16.mxu0 0
      %1499 = vmatpush1.bf16.msra.mxu0 %v1496
      %1500 = vmatprep.subr.bf16.mxu0 0
      %1501 = vmatpush1.bf16.msra.mxu0 0
      %1502 = vmatprep.subr.bf16.mxu0 0
      %1503 = vmatpush1.bf16.msra.mxu0 0
      %1504 = vmatprep.subr.bf16.mxu0 0
      %1505 = vmatpush1.bf16.msra.mxu0 0
      %1506 = vmatprep.subr.bf16.mxu0 0
      %1507 = vmatpush1.bf16.msra.mxu0 0
      %1508 = vmatprep.subr.bf16.mxu0 0
      %1509 = vmatpush1.bf16.msra.mxu0 0
      %1510 = vmatprep.subr.bf16.mxu0 0
      %1511 = vmatpush1.bf16.msra.mxu0 0
      %1512 = vmatprep.subr.bf16.mxu0 0
      %1513 = vmatpush1.bf16.msra.mxu0 0
      %1514 = vmatprep.subr.bf16.mxu0 0
      %1515 = vmatpush1.bf16.msra.mxu0 0
      %1516 = vmatprep.subr.bf16.mxu0 0
      %1517 = vmatpush1.bf16.msra.mxu0 0
      %1518 = vmatprep.subr.bf16.mxu0 0
      %1519 = vmatpush1.bf16.msra.mxu0 0
      %1520 = vmatprep.subr.bf16.mxu0 0
      %1521 = vmatpush1.bf16.msra.mxu0 0
      %1522 = vmatprep.subr.bf16.mxu0 0
      %1523 = vmatpush1.bf16.msra.mxu0 0
      %1524 = vmatprep.subr.bf16.mxu0 0
      %1525 = vmatpush1.bf16.msra.mxu0 0
      %1526 = vmatprep.subr.bf16.mxu0 0
      %1527 = vmatpush1.bf16.msra.mxu0 0
      %1528 = vmatprep.subr.bf16.mxu0 0
      %1529 = vmatpush1.bf16.msra.mxu0 0
      %1530 = vmatprep.mubr.bf16.mxu0 0
      %1531 = vmatmul.mubr.bf16.gmra.mrb[0].mxu0 %v1493
      %v1532 = vpop.f32.mrb[0].mxu0
      %v1533 = vadd.f32 0.0, %v1532
      %v1534 = vpop.f32.mrb[0].mxu0
      %v1535 = vpop.f32.mrb[0].mxu0
      %v1536 = vpop.f32.mrb[0].mxu0
      %1537 = vdwg.mxu0
      %v1538 = vadd.f32 %v1475, %v1533
      %s1539 = scalar_lea.vmem %s3, 80
      %v1540 = vld [vmem:[%s1539] sm:$0xf]
      %1541 = vrot.lane.b32.xlu0 %v1485, 126
      %v1542 = vpop.permute.xlu0 %1541
      %1543 = vrot.lane.b32.xlu0 %v1486, 126
      %v1544 = vpop.permute.xlu0 %1543
      %v1545 = vsel %vm558, %v1542, %v1544
      %v1547 = vsel %vm458, %v1540, 0
      %v1550 = vsel %vm462, %v1545, 0
      %1552 = vmatprep.subr.bf16.mxu0 0
      %1553 = vmatpush1.bf16.msra.mxu0 %v1550
      %1554 = vmatprep.subr.bf16.mxu0 0
      %1555 = vmatpush1.bf16.msra.mxu0 0
      %1556 = vmatprep.subr.bf16.mxu0 0
      %1557 = vmatpush1.bf16.msra.mxu0 0
      %1558 = vmatprep.subr.bf16.mxu0 0
      %1559 = vmatpush1.bf16.msra.mxu0 0
      %1560 = vmatprep.subr.bf16.mxu0 0
      %1561 = vmatpush1.bf16.msra.mxu0 0
      %1562 = vmatprep.subr.bf16.mxu0 0
      %1563 = vmatpush1.bf16.msra.mxu0 0
      %1564 = vmatprep.subr.bf16.mxu0 0
      %1565 = vmatpush1.bf16.msra.mxu0 0
      %1566 = vmatprep.subr.bf16.mxu0 0
      %1567 = vmatpush1.bf16.msra.mxu0 0
      %1568 = vmatprep.subr.bf16.mxu0 0
      %1569 = vmatpush1.bf16.msra.mxu0 0
      %1570 = vmatprep.subr.bf16.mxu0 0
      %1571 = vmatpush1.bf16.msra.mxu0 0
      %1572 = vmatprep.subr.bf16.mxu0 0
      %1573 = vmatpush1.bf16.msra.mxu0 0
      %1574 = vmatprep.subr.bf16.mxu0 0
      %1575 = vmatpush1.bf16.msra.mxu0 0
      %1576 = vmatprep.subr.bf16.mxu0 0
      %1577 = vmatpush1.bf16.msra.mxu0 0
      %1578 = vmatprep.subr.bf16.mxu0 0
      %1579 = vmatpush1.bf16.msra.mxu0 0
      %1580 = vmatprep.subr.bf16.mxu0 0
      %1581 = vmatpush1.bf16.msra.mxu0 0
      %1582 = vmatprep.subr.bf16.mxu0 0
      %1583 = vmatpush1.bf16.msra.mxu0 0
      %1584 = vmatprep.mubr.bf16.mxu0 0
      %1585 = vmatmul.mubr.bf16.gmra.mrb[0].mxu0 %v1547
      %v1586 = vpop.f32.mrb[0].mxu0
      %v1587 = vadd.f32 0.0, %v1586
      %v1588 = vpop.f32.mrb[0].mxu0
      %v1589 = vpop.f32.mrb[0].mxu0
      %v1590 = vpop.f32.mrb[0].mxu0
      %1591 = vdwg.mxu0
      %v1592 = vadd.f32 %v1538, %v1587
      %s1593 = scalar_lea.vmem %s3, 84
      %v1594 = vld [vmem:[%s1593] sm:$0xf]
      %1595 = vrot.lane.b32.xlu0 %v1485, 118
      %v1596 = vpop.permute.xlu0 %1595
      %1597 = vrot.lane.b32.xlu0 %v1486, 118
      %v1598 = vpop.permute.xlu0 %1597
      %v1599 = vsel %vm613, %v1596, %v1598
      %v1601 = vsel %vm458, %v1594, 0
      %v1604 = vsel %vm462, %v1599, 0
      %1606 = vmatprep.subr.bf16.mxu0 0
      %1607 = vmatpush1.bf16.msra.mxu0 %v1604
      %1608 = vmatprep.subr.bf16.mxu0 0
      %1609 = vmatpush1.bf16.msra.mxu0 0
      %1610 = vmatprep.subr.bf16.mxu0 0
      %1611 = vmatpush1.bf16.msra.mxu0 0
      %1612 = vmatprep.subr.bf16.mxu0 0
      %1613 = vmatpush1.bf16.msra.mxu0 0
      %1614 = vmatprep.subr.bf16.mxu0 0
      %1615 = vmatpush1.bf16.msra.mxu0 0
      %1616 = vmatprep.subr.bf16.mxu0 0
      %1617 = vmatpush1.bf16.msra.mxu0 0
      %1618 = vmatprep.subr.bf16.mxu0 0
      %1619 = vmatpush1.bf16.msra.mxu0 0
      %1620 = vmatprep.subr.bf16.mxu0 0
      %1621 = vmatpush1.bf16.msra.mxu0 0
      %1622 = vmatprep.subr.bf16.mxu0 0
      %1623 = vmatpush1.bf16.msra.mxu0 0
      %1624 = vmatprep.subr.bf16.mxu0 0
      %1625 = vmatpush1.bf16.msra.mxu0 0
      %1626 = vmatprep.subr.bf16.mxu0 0
      %1627 = vmatpush1.bf16.msra.mxu0 0
      %1628 = vmatprep.subr.bf16.mxu0 0
      %1629 = vmatpush1.bf16.msra.mxu0 0
      %1630 = vmatprep.subr.bf16.mxu0 0
      %1631 = vmatpush1.bf16.msra.mxu0 0
      %1632 = vmatprep.subr.bf16.mxu0 0
      %1633 = vmatpush1.bf16.msra.mxu0 0
      %1634 = vmatprep.subr.bf16.mxu0 0
      %1635 = vmatpush1.bf16.msra.mxu0 0
      %1636 = vmatprep.subr.bf16.mxu0 0
      %1637 = vmatpush1.bf16.msra.mxu0 0
      %1638 = vmatprep.mubr.bf16.mxu0 0
      %1639 = vmatmul.mubr.bf16.gmra.mrb[0].mxu0 %v1601
      %v1640 = vpop.f32.mrb[0].mxu0
      %v1641 = vadd.f32 0.0, %v1640
      %v1642 = vpop.f32.mrb[0].mxu0
      %v1643 = vpop.f32.mrb[0].mxu0
      %v1644 = vpop.f32.mrb[0].mxu0
      %1645 = vdwg.mxu0
      %v1646 = vadd.f32 %v1592, %v1641
      %s1647 = scalar_lea.vmem %s3, 88
      %v1648 = vld [vmem:[%s1647] sm:$0xf]
      %1649 = vrot.lane.b32.xlu0 %v1485, 117
      %v1650 = vpop.permute.xlu0 %1649
      %1651 = vrot.lane.b32.xlu0 %v1486, 117
      %v1652 = vpop.permute.xlu0 %1651
      %v1653 = vsel %vm668, %v1650, %v1652
      %v1655 = vsel %vm458, %v1648, 0
      %v1658 = vsel %vm462, %v1653, 0
      %1660 = vmatprep.subr.bf16.mxu0 0
      %1661 = vmatpush1.bf16.msra.mxu0 %v1658
      %1662 = vmatprep.subr.bf16.mxu0 0
      %1663 = vmatpush1.bf16.msra.mxu0 0
      %1664 = vmatprep.subr.bf16.mxu0 0
      %1665 = vmatpush1.bf16.msra.mxu0 0
      %1666 = vmatprep.subr.bf16.mxu0 0
      %1667 = vmatpush1.bf16.msra.mxu0 0
      %1668 = vmatprep.subr.bf16.mxu0 0
      %1669 = vmatpush1.bf16.msra.mxu0 0
      %1670 = vmatprep.subr.bf16.mxu0 0
      %1671 = vmatpush1.bf16.msra.mxu0 0
      %1672 = vmatprep.subr.bf16.mxu0 0
      %1673 = vmatpush1.bf16.msra.mxu0 0
      %1674 = vmatprep.subr.bf16.mxu0 0
      %1675 = vmatpush1.bf16.msra.mxu0 0
      %1676 = vmatprep.subr.bf16.mxu0 0
      %1677 = vmatpush1.bf16.msra.mxu0 0
      %1678 = vmatprep.subr.bf16.mxu0 0
      %1679 = vmatpush1.bf16.msra.mxu0 0
      %1680 = vmatprep.subr.bf16.mxu0 0
      %1681 = vmatpush1.bf16.msra.mxu0 0
      %1682 = vmatprep.subr.bf16.mxu0 0
      %1683 = vmatpush1.bf16.msra.mxu0 0
      %1684 = vmatprep.subr.bf16.mxu0 0
      %1685 = vmatpush1.bf16.msra.mxu0 0
      %1686 = vmatprep.subr.bf16.mxu0 0
      %1687 = vmatpush1.bf16.msra.mxu0 0
      %1688 = vmatprep.subr.bf16.mxu0 0
      %1689 = vmatpush1.bf16.msra.mxu0 0
      %1690 = vmatprep.subr.bf16.mxu0 0
      %1691 = vmatpush1.bf16.msra.mxu0 0
      %1692 = vmatprep.mubr.bf16.mxu0 0
      %1693 = vmatmul.mubr.bf16.gmra.mrb[0].mxu0 %v1655
      %v1694 = vpop.f32.mrb[0].mxu0
      %v1695 = vadd.f32 0.0, %v1694
      %v1696 = vpop.f32.mrb[0].mxu0
      %v1697 = vpop.f32.mrb[0].mxu0
      %v1698 = vpop.f32.mrb[0].mxu0
      %1699 = vdwg.mxu0
      %v1700 = vadd.f32 %v1646, %v1695
      %s1701 = scalar_lea.vmem %s3, 92
      %v1702 = vld [vmem:[%s1701] sm:$0xf]
      %1703 = vrot.lane.b32.xlu0 %v1485, 116
      %v1704 = vpop.permute.xlu0 %1703
      %1705 = vrot.lane.b32.xlu0 %v1486, 116
      %v1706 = vpop.permute.xlu0 %1705
      %v1707 = vsel %vm723, %v1704, %v1706
      %v1709 = vsel %vm458, %v1702, 0
      %v1712 = vsel %vm462, %v1707, 0
      %1714 = vmatprep.subr.bf16.mxu0 0
      %1715 = vmatpush1.bf16.msra.mxu0 %v1712
      %1716 = vmatprep.subr.bf16.mxu0 0
      %1717 = vmatpush1.bf16.msra.mxu0 0
      %1718 = vmatprep.subr.bf16.mxu0 0
      %1719 = vmatpush1.bf16.msra.mxu0 0
      %1720 = vmatprep.subr.bf16.mxu0 0
      %1721 = vmatpush1.bf16.msra.mxu0 0
      %1722 = vmatprep.subr.bf16.mxu0 0
      %1723 = vmatpush1.bf16.msra.mxu0 0
      %1724 = vmatprep.subr.bf16.mxu0 0
      %1725 = vmatpush1.bf16.msra.mxu0 0
      %1726 = vmatprep.subr.bf16.mxu0 0
      %1727 = vmatpush1.bf16.msra.mxu0 0
      %1728 = vmatprep.subr.bf16.mxu0 0
      %1729 = vmatpush1.bf16.msra.mxu0 0
      %1730 = vmatprep.subr.bf16.mxu0 0
      %1731 = vmatpush1.bf16.msra.mxu0 0
      %1732 = vmatprep.subr.bf16.mxu0 0
      %1733 = vmatpush1.bf16.msra.mxu0 0
      %1734 = vmatprep.subr.bf16.mxu0 0
      %1735 = vmatpush1.bf16.msra.mxu0 0
      %1736 = vmatprep.subr.bf16.mxu0 0
      %1737 = vmatpush1.bf16.msra.mxu0 0
      %1738 = vmatprep.subr.bf16.mxu0 0
      %1739 = vmatpush1.bf16.msra.mxu0 0
      %1740 = vmatprep.subr.bf16.mxu0 0
      %1741 = vmatpush1.bf16.msra.mxu0 0
      %1742 = vmatprep.subr.bf16.mxu0 0
      %1743 = vmatpush1.bf16.msra.mxu0 0
      %1744 = vmatprep.subr.bf16.mxu0 0
      %1745 = vmatpush1.bf16.msra.mxu0 0
      %1746 = vmatprep.mubr.bf16.mxu0 0
      %1747 = vmatmul.mubr.bf16.gmra.mrb[0].mxu0 %v1709
      %v1748 = vpop.f32.mrb[0].mxu0
      %v1749 = vadd.f32 0.0, %v1748
      %v1750 = vpop.f32.mrb[0].mxu0
      %v1751 = vpop.f32.mrb[0].mxu0
      %v1752 = vpop.f32.mrb[0].mxu0
      %1753 = vdwg.mxu0
      %v1754 = vadd.f32 %v1700, %v1749
      %s1755 = scalar_lea.vmem %s3, 96
      %v1756 = vld [vmem:[%s1755] sm:$0xf]
      %1757 = vrot.lane.b32.xlu0 %v1485, 108
      %v1758 = vpop.permute.xlu0 %1757
      %1759 = vrot.lane.b32.xlu0 %v1486, 108
      %v1760 = vpop.permute.xlu0 %1759
      %v1761 = vsel %vm778, %v1758, %v1760
      %v1763 = vsel %vm458, %v1756, 0
      %v1766 = vsel %vm462, %v1761, 0
      %1768 = vmatprep.subr.bf16.mxu0 0
      %1769 = vmatpush1.bf16.msra.mxu0 %v1766
      %1770 = vmatprep.subr.bf16.mxu0 0
      %1771 = vmatpush1.bf16.msra.mxu0 0
      %1772 = vmatprep.subr.bf16.mxu0 0
      %1773 = vmatpush1.bf16.msra.mxu0 0
      %1774 = vmatprep.subr.bf16.mxu0 0
      %1775 = vmatpush1.bf16.msra.mxu0 0
      %1776 = vmatprep.subr.bf16.mxu0 0
      %1777 = vmatpush1.bf16.msra.mxu0 0
      %1778 = vmatprep.subr.bf16.mxu0 0
      %1779 = vmatpush1.bf16.msra.mxu0 0
      %1780 = vmatprep.subr.bf16.mxu0 0
      %1781 = vmatpush1.bf16.msra.mxu0 0
      %1782 = vmatprep.subr.bf16.mxu0 0
      %1783 = vmatpush1.bf16.msra.mxu0 0
      %1784 = vmatprep.subr.bf16.mxu0 0
      %1785 = vmatpush1.bf16.msra.mxu0 0
      %1786 = vmatprep.subr.bf16.mxu0 0
      %1787 = vmatpush1.bf16.msra.mxu0 0
      %1788 = vmatprep.subr.bf16.mxu0 0
      %1789 = vmatpush1.bf16.msra.mxu0 0
      %1790 = vmatprep.subr.bf16.mxu0 0
      %1791 = vmatpush1.bf16.msra.mxu0 0
      %1792 = vmatprep.subr.bf16.mxu0 0
      %1793 = vmatpush1.bf16.msra.mxu0 0
      %1794 = vmatprep.subr.bf16.mxu0 0
      %1795 = vmatpush1.bf16.msra.mxu0 0
      %1796 = vmatprep.subr.bf16.mxu0 0
      %1797 = vmatpush1.bf16.msra.mxu0 0
      %1798 = vmatprep.subr.bf16.mxu0 0
      %1799 = vmatpush1.bf16.msra.mxu0 0
      %1800 = vmatprep.mubr.bf16.mxu0 0
      %1801 = vmatmul.mubr.bf16.gmra.mrb[0].mxu0 %v1763
      %v1802 = vpop.f32.mrb[0].mxu0
      %v1803 = vadd.f32 0.0, %v1802
      %v1804 = vpop.f32.mrb[0].mxu0
      %v1805 = vpop.f32.mrb[0].mxu0
      %v1806 = vpop.f32.mrb[0].mxu0
      %1807 = vdwg.mxu0
      %v1808 = vadd.f32 %v1754, %v1803
      %s1809 = scalar_lea.vmem %s3, 100
      %v1810 = vld [vmem:[%s1809] sm:$0xf]
      %1811 = vrot.lane.b32.xlu0 %v1485, 107
      %v1812 = vpop.permute.xlu0 %1811
      %1813 = vrot.lane.b32.xlu0 %v1486, 107
      %v1814 = vpop.permute.xlu0 %1813
      %v1815 = vsel %vm833, %v1812, %v1814
      %v1817 = vsel %vm458, %v1810, 0
      %v1820 = vsel %vm462, %v1815, 0
      %1822 = vmatprep.subr.bf16.mxu0 0
      %1823 = vmatpush1.bf16.msra.mxu0 %v1820
      %1824 = vmatprep.subr.bf16.mxu0 0
      %1825 = vmatpush1.bf16.msra.mxu0 0
      %1826 = vmatprep.subr.bf16.mxu0 0
      %1827 = vmatpush1.bf16.msra.mxu0 0
      %1828 = vmatprep.subr.bf16.mxu0 0
      %1829 = vmatpush1.bf16.msra.mxu0 0
      %1830 = vmatprep.subr.bf16.mxu0 0
      %1831 = vmatpush1.bf16.msra.mxu0 0
      %1832 = vmatprep.subr.bf16.mxu0 0
      %1833 = vmatpush1.bf16.msra.mxu0 0
      %1834 = vmatprep.subr.bf16.mxu0 0
      %1835 = vmatpush1.bf16.msra.mxu0 0
      %1836 = vmatprep.subr.bf16.mxu0 0
      %1837 = vmatpush1.bf16.msra.mxu0 0
      %1838 = vmatprep.subr.bf16.mxu0 0
      %1839 = vmatpush1.bf16.msra.mxu0 0
      %1840 = vmatprep.subr.bf16.mxu0 0
      %1841 = vmatpush1.bf16.msra.mxu0 0
      %1842 = vmatprep.subr.bf16.mxu0 0
      %1843 = vmatpush1.bf16.msra.mxu0 0
      %1844 = vmatprep.subr.bf16.mxu0 0
      %1845 = vmatpush1.bf16.msra.mxu0 0
      %1846 = vmatprep.subr.bf16.mxu0 0
      %1847 = vmatpush1.bf16.msra.mxu0 0
      %1848 = vmatprep.subr.bf16.mxu0 0
      %1849 = vmatpush1.bf16.msra.mxu0 0
      %1850 = vmatprep.subr.bf16.mxu0 0
      %1851 = vmatpush1.bf16.msra.mxu0 0
      %1852 = vmatprep.subr.bf16.mxu0 0
      %1853 = vmatpush1.bf16.msra.mxu0 0
      %1854 = vmatprep.mubr.bf16.mxu0 0
      %1855 = vmatmul.mubr.bf16.gmra.mrb[0].mxu0 %v1817
      %v1856 = vpop.f32.mrb[0].mxu0
      %v1857 = vadd.f32 0.0, %v1856
      %v1858 = vpop.f32.mrb[0].mxu0
      %v1859 = vpop.f32.mrb[0].mxu0
      %v1860 = vpop.f32.mrb[0].mxu0
      %1861 = vdwg.mxu0
      %v1862 = vadd.f32 %v1808, %v1857
      %s1863 = scalar_lea.vmem %s3, 104
      %v1864 = vld [vmem:[%s1863] sm:$0xf]
      %1865 = vrot.lane.b32.xlu0 %v1485, 106
      %v1866 = vpop.permute.xlu0 %1865
      %1867 = vrot.lane.b32.xlu0 %v1486, 106
      %v1868 = vpop.permute.xlu0 %1867
      %v1869 = vsel %vm888, %v1866, %v1868
      %v1871 = vsel %vm458, %v1864, 0
      %v1874 = vsel %vm462, %v1869, 0
      %1876 = vmatprep.subr.bf16.mxu0 0
      %1877 = vmatpush1.bf16.msra.mxu0 %v1874
      %1878 = vmatprep.subr.bf16.mxu0 0
      %1879 = vmatpush1.bf16.msra.mxu0 0
      %1880 = vmatprep.subr.bf16.mxu0 0
      %1881 = vmatpush1.bf16.msra.mxu0 0
      %1882 = vmatprep.subr.bf16.mxu0 0
      %1883 = vmatpush1.bf16.msra.mxu0 0
      %1884 = vmatprep.subr.bf16.mxu0 0
      %1885 = vmatpush1.bf16.msra.mxu0 0
      %1886 = vmatprep.subr.bf16.mxu0 0
      %1887 = vmatpush1.bf16.msra.mxu0 0
      %1888 = vmatprep.subr.bf16.mxu0 0
      %1889 = vmatpush1.bf16.msra.mxu0 0
      %1890 = vmatprep.subr.bf16.mxu0 0
      %1891 = vmatpush1.bf16.msra.mxu0 0
      %1892 = vmatprep.subr.bf16.mxu0 0
      %1893 = vmatpush1.bf16.msra.mxu0 0
      %1894 = vmatprep.subr.bf16.mxu0 0
      %1895 = vmatpush1.bf16.msra.mxu0 0
      %1896 = vmatprep.subr.bf16.mxu0 0
      %1897 = vmatpush1.bf16.msra.mxu0 0
      %1898 = vmatprep.subr.bf16.mxu0 0
      %1899 = vmatpush1.bf16.msra.mxu0 0
      %1900 = vmatprep.subr.bf16.mxu0 0
      %1901 = vmatpush1.bf16.msra.mxu0 0
      %1902 = vmatprep.subr.bf16.mxu0 0
      %1903 = vmatpush1.bf16.msra.mxu0 0
      %1904 = vmatprep.subr.bf16.mxu0 0
      %1905 = vmatpush1.bf16.msra.mxu0 0
      %1906 = vmatprep.subr.bf16.mxu0 0
      %1907 = vmatpush1.bf16.msra.mxu0 0
      %1908 = vmatprep.mubr.bf16.mxu0 0
      %1909 = vmatmul.mubr.bf16.gmra.mrb[0].mxu0 %v1871
      %v1910 = vpop.f32.mrb[0].mxu0
      %v1911 = vadd.f32 0.0, %v1910
      %v1912 = vpop.f32.mrb[0].mxu0
      %v1913 = vpop.f32.mrb[0].mxu0
      %v1914 = vpop.f32.mrb[0].mxu0
      %1915 = vdwg.mxu0
      %v1916 = vadd.f32 %v1862, %v1911
      %v1917 = vpack.c.bf16 %v1916, %v1916
      %1918 = vst [vmem:[%s419] sm:$0xf] %v1917
      %v1919 = vld [vmem:[%s4] sm:$0x1]
      %v1921 = vlaneseq
      %v1922 = vshrl.u32 %v1921, 7
      %v1923 = vsub.s32 0, %v1922
      %v1924 = vrot.slane %v1919, %v1923
      %v1926 = vmul.f32 %v1916, %v1924
      %1927 = vadd.xlane.f32.xlu0 %v1926
      %v1928 = vpop.xlane.xlu0 %1927
      %vm1929 = vcmask 7168
      %1930 = vst.msk [vmem:[%s427] sm:$0xff] %vm1929, %v1928
      %v1931 = vmul.f32 %v1926, %v1926
      %1932 = vadd.xlane.f32.xlu0 %v1931
      %v1933 = vpop.xlane.xlu0 %1932
      %1934 = vst.msk [vmem:[%s435] sm:$0xff] %vm1929, %v1933
      %p1935 = scmp.lt.s32.totalorder %s23, 1
      %s1936 = scalar_select %p1935, %s23, 1
      %p1937 = scmp.lt.s32.totalorder %s24, 5
      %s1938 = scalar_select %p1937, %s24, 5
      %s1939 = smul.addr %s1936, 6
      %s1940 = sadd.s32 %s1938, %s1939
      %s1941 = smul.addr %s1940, 4
      %s1942 = scalar_lea.vmem %s5, %s1941
      %p1943 = scmp.lt.s32.totalorder %s23, 1
      %s1944 = scalar_select %p1943, %s23, 1
      %p1945 = scmp.lt.s32.totalorder %s24, 5
      %s1946 = scalar_select %p1945, %s24, 5
      %s1947 = smul.addr %s1944, 6
      %s1948 = sadd.s32 %s1946, %s1947
      %s1949 = smul.addr %s1948, 8
      %s1950 = scalar_lea.vmem %s6, %s1949
      %p1951 = scmp.lt.s32.totalorder %s23, 1
      %s1952 = scalar_select %p1951, %s23, 1
      %p1953 = scmp.lt.s32.totalorder %s24, 5
      %s1954 = scalar_select %p1953, %s24, 5
      %s1955 = smul.addr %s1952, 6
      %s1956 = sadd.s32 %s1954, %s1955
      %s1957 = smul.addr %s1956, 8
      %s1958 = scalar_lea.vmem %s7, %s1957
      // Predicated region
      $region41: #{luconv_forward.2} parent=39 // pred_check
        %p1959 = pneg %p187
      $region42: #{luconv_forward.2} parent=39 // pred_check_branch
        %1961 = sbr.rel (%p1959) target = $region44
      $region43: #{luconv_forward.2} parent=39 // pred_region
        _
      $region44: #{luconv_forward.2} parent=39 // pred_fallthru
        _
      // Predicated region
      $region45: #{luconv_forward.2} parent=39 // pred_check
        %p1962 = pneg %p215
      $region46: #{luconv_forward.2} parent=39 // pred_check_branch
        %1964 = sbr.rel (%p1962) target = $region48
      $region47: #{luconv_forward.2} parent=39 // pred_region
        _
      $region48: #{luconv_forward.2} parent=39 // pred_fallthru
        _
      // Predicated region
      $region49: #{luconv_forward.2} parent=39 // pred_check
        %p1965 = pneg %p243
      $region50: #{luconv_forward.2} parent=39 // pred_check_branch
        %1967 = sbr.rel (%p1965) target = $region52
      $region51: #{luconv_forward.2} parent=39 // pred_region
        _
      $region52: #{luconv_forward.2} parent=39 // pred_fallthru
        _
    $region40: #{luconv_forward.2} parent=5 // pred_fallthru
      _
    %p1968 = scmp.le.s32.totalorder 2, %s14
    // Predicated region
    $region53: #{luconv_forward.2} parent=5 // pred_check
      %p1969 = pneg %p1968
    $region54: #{luconv_forward.2} parent=5 // pred_check_branch
      %1971 = sbr.rel (%p1969) target = $region56
    $region55: #{luconv_forward.2} parent=5 // pred_region
      %s1972 = ssub.s32 %s14, 2
      // Predicated region
      $region57: #{luconv_forward.2} parent=55 // pred_check
        %p1973 = pneg %p193
      $region58: #{luconv_forward.2} parent=55 // pred_check_branch
        %1975 = sbr.rel (%p1973) target = $region60
      $region59: #{luconv_forward.2} parent=55 // pred_region
        %p1976 = scmp.lt.s32.totalorder %s25, 1
        %s1977 = scalar_select %p1976, %s25, 1
        %p1978 = scmp.lt.s32.totalorder %s26, 5
        %s1979 = scalar_select %p1978, %s26, 5
        %s1980 = smul.addr %s1977, 6
        %s1981 = sadd.s32 %s1979, %s1980
        %s1982 = smul.addr %s1981, 4
        %s1983 = scalar_lea.vmem %s5, %s1982
      $region60: #{luconv_forward.2} parent=55 // pred_fallthru
        _
      // Predicated region
      $region61: #{luconv_forward.2} parent=55 // pred_check
        %p1984 = pneg %p221
      $region62: #{luconv_forward.2} parent=55 // pred_check_branch
        %1986 = sbr.rel (%p1984) target = $region64
      $region63: #{luconv_forward.2} parent=55 // pred_region
        %p1987 = scmp.lt.s32.totalorder %s25, 1
        %s1988 = scalar_select %p1987, %s25, 1
        %p1989 = scmp.lt.s32.totalorder %s26, 5
        %s1990 = scalar_select %p1989, %s26, 5
        %s1991 = smul.addr %s1988, 6
        %s1992 = sadd.s32 %s1990, %s1991
        %s1993 = smul.addr %s1992, 8
        %s1994 = scalar_lea.vmem %s6, %s1993
      $region64: #{luconv_forward.2} parent=55 // pred_fallthru
        _
      // Predicated region
      $region65: #{luconv_forward.2} parent=55 // pred_check
        %p1995 = pneg %p249
      $region66: #{luconv_forward.2} parent=55 // pred_check_branch
        %1997 = sbr.rel (%p1995) target = $region68
      $region67: #{luconv_forward.2} parent=55 // pred_region
        %p1998 = scmp.lt.s32.totalorder %s25, 1
        %s1999 = scalar_select %p1998, %s25, 1
        %p2000 = scmp.lt.s32.totalorder %s26, 5
        %s2001 = scalar_select %p2000, %s26, 5
        %s2002 = smul.addr %s1999, 6
        %s2003 = sadd.s32 %s2001, %s2002
        %s2004 = smul.addr %s2003, 8
        %s2005 = scalar_lea.vmem %s7, %s2004
      $region68: #{luconv_forward.2} parent=55 // pred_fallthru
        _
    $region56: #{luconv_forward.2} parent=5 // pred_fallthru
      _
  $region6: #{luconv_forward.2} parent=0 // loop_footer
    %s18 = sadd.s32 1, %s14
  $region7: #{luconv_forward.2} parent=0 // loop_footer_branch
    %13 = sbr.rel target = $region3
  $region8: #{luconv_forward.2} parent=0 // loop_exit
    _

</llo_original>
